<compile_context>
chip_gen: v7x
topology: tpu7x:2x2x1
jax: 0.10.0
libtpu: 0.0.40
codegen_flags: <defaults>
</compile_context>

<pallas_src>
import jax
import jax.numpy as jnp
from jax.experimental import pallas as pl
from jax.experimental.pallas import tpu as pltpu

# ---------------------------------------------------------------------------
# Small synthetic DistilBERT configuration (module hard-codes 768; a small
# hidden size is used for the synthetic kernel).
# ---------------------------------------------------------------------------
VOCAB = 100
MAX_POS = 32
B, S, H = 2, 8, 64          # batch, seq, hidden
N_HEADS = 2
D_HEAD = H // N_HEADS
FFN = 128
N_LAYERS = 2
NUM_CLASSES = 4
LN_EPS = 1e-12
LOGITS_PAD = 128            # lane-dense padded classifier output width
SCALE = 1.0 / float(D_HEAD) ** 0.5


def _layer_norm(x, gamma, beta, eps=LN_EPS):
    mu = jnp.mean(x, axis=-1, keepdims=True)
    var = jnp.mean((x - mu) ** 2, axis=-1, keepdims=True)
    return (x - mu) * jax.lax.rsqrt(var + eps) * gamma + beta


# ---------------------------------------------------------------------------
# Fused kernel: all encoder layers + classification head.
#   grid = (N_LAYERS,)  ("arbitrary": x carried in the resident x_out block)
# ---------------------------------------------------------------------------
def fused_encoder_kernel(
    # inputs
    x0_ref, mask_ref,
    wqkv_ref, wo_ref, w1_ref, w2_ref, small_ref,
    wpre_ref, bpre_ref, wcls_ref, bcls_ref,
    # outputs
    x_out_ref, logits_ref,
):
    layer = pl.program_id(0)

    # Layer 0: the resident output block doubles as the cross-layer carry.
    @pl.when(layer == 0)
    def _():
        x_out_ref[...] = x0_ref[...]

    x = x_out_ref[...]                               # (B*S, H) f32
    xb = x.astype(jnp.bfloat16)

    # ---- unpack the single packed small-params tile (one DMA per layer) ---
    sp = small_ref[0]                                # (8, 128) f32
    bq = sp[0:1, 0:H];     bk = sp[0:1, H:2 * H]
    bv = sp[1:2, 0:H];     bo = sp[1:2, H:2 * H]
    b1 = sp[2:3, 0:FFN]
    b2 = sp[3:4, 0:H];     ln1_g = sp[3:4, H:2 * H]
    ln1_b = sp[4:5, 0:H];  ln2_g = sp[4:5, H:2 * H]
    ln2_b = sp[5:6, 0:H]

    # ---- Q/K/V projections from per-head weight slabs ---------------------
    # slab index = proj * N_HEADS + head, proj in {0:q, 1:k, 2:v}; every dot
    # output is lane-contiguous (no sub-128-lane activation slicing).
    W = wqkv_ref[0]                                  # (3*NH, H, Dh) bf16
    q_heads, k_heads, v_heads = [], [], []
    for h in range(N_HEADS):
        hs = slice(h * D_HEAD, (h + 1) * D_HEAD)
        qh = jnp.dot(xb, W[0 * N_HEADS + h],
                     preferred_element_type=jnp.float32) + bq[:, hs]
        kh = jnp.dot(xb, W[1 * N_HEADS + h],
                     preferred_element_type=jnp.float32) + bk[:, hs]
        vh = jnp.dot(xb, W[2 * N_HEADS + h],
                     preferred_element_type=jnp.float32) + bv[:, hs]
        q_heads.append(qh.reshape(B, S, D_HEAD))
        k_heads.append(kh.reshape(B, S, D_HEAD))
        v_heads.append(vh.reshape(B, S, D_HEAD))

    # ---- heads folded into the batch axis (head-major rows: h*B + b) ------
    qf = jnp.concatenate(q_heads, axis=0).astype(jnp.bfloat16)   # (NH*B, S, Dh)
    kf = jnp.concatenate(k_heads, axis=0).astype(jnp.bfloat16)
    vf = jnp.concatenate(v_heads, axis=0).astype(jnp.bfloat16)

    scores = jnp.einsum("Bqd,Bkd->Bqk", qf, kf,
                        preferred_element_type=jnp.float32) * SCALE
    # single mask add per layer (mask arrives pre-folded to (NH*B, S))
    scores = scores + mask_ref[...][:, None, :]
    scores = scores - jnp.max(scores, axis=-1, keepdims=True)
    p = jnp.exp(scores)
    # approx reciprocal runs on the EUP slot; approx=False for exact parity.
    p = p * pl.reciprocal(jnp.sum(p, axis=-1, keepdims=True), approx=True)
    ctx = jnp.einsum("Bqk,Bkd->Bqd", p.astype(jnp.bfloat16), vf,
                     preferred_element_type=jnp.float32)          # (NH*B, S, Dh)

    # ---- un-fold heads: one lane concatenation, stays in vregs ------------
    ctx = jnp.concatenate(
        [ctx[h * B:(h + 1) * B] for h in range(N_HEADS)], axis=-1)  # (B, S, H)
    ctx = ctx.reshape(B * S, H)

    # ---- attention output projection + residual + LayerNorm ---------------
    attn = jnp.dot(ctx.astype(jnp.bfloat16), wo_ref[0],
                   preferred_element_type=jnp.float32) + bo
    x = _layer_norm(x + attn, ln1_g, ln1_b)

    # ---- GELU FFN + residual + LayerNorm -----------------------------------
    hmid = jnp.dot(x.astype(jnp.bfloat16), w1_ref[0],
                   preferred_element_type=jnp.float32) + b1
    # TODO(synk): HF DistilBERT uses exact (erf) GELU; tanh approximation is
    # used because erf lowering support in Mosaic is not guaranteed.
    hmid = jax.nn.gelu(hmid)
    ffn = jnp.dot(hmid.astype(jnp.bfloat16), w2_ref[0],
                  preferred_element_type=jnp.float32) + b2
    x = _layer_norm(x + ffn, ln2_g, ln2_b)

    x_out_ref[...] = x                               # carry to next layer

    # ---- last layer: fused classification head -----------------------------
    @pl.when(layer == pl.num_programs(0) - 1)
    def _():
        cls = x.reshape(B, S, H)[:, 0, :]            # CLS embeddings (B, H)
        hh = jnp.dot(cls.astype(jnp.bfloat16), wpre_ref[...],
                     preferred_element_type=jnp.float32) + bpre_ref[...]
        hh = jnp.maximum(hh, 0.0)                    # ReLU; dropout(0.1)=identity
        logits = jnp.dot(hh.astype(jnp.bfloat16), wcls_ref[...],
                         preferred_element_type=jnp.float32) + bcls_ref[...]
        logits_ref[...] = logits.astype(logits_ref.dtype)   # (B, 128) lane-dense


def encoder_and_head(x_flat, mask_folded, enc, head):
    """x_flat: (B*S, H) f32; mask_folded: (N_HEADS*B, S) f32 additive bias."""
    inputs = [
        x_flat, mask_folded,
        enc["wqkv"], enc["wo"], enc["w1"], enc["w2"], enc["small"],
        head["w_pre"], head["b_pre"], head["w_cls"], head["b_cls"],
    ]

    def resident(arr):                      # whole array, same block every step
        nd = arr.ndim
        return pl.BlockSpec(arr.shape, lambda l, _n=nd: (0,) * _n)

    def per_layer(arr):                     # slice layer l off the leading axis
        nd = arr.ndim
        return pl.BlockSpec((1,) + arr.shape[1:],
                            lambda l, _n=nd: (l,) + (0,) * (_n - 1))

    in_specs = [
        resident(x_flat), resident(mask_folded),
        per_layer(enc["wqkv"]), per_layer(enc["wo"]),
        per_layer(enc["w1"]), per_layer(enc["w2"]), per_layer(enc["small"]),
        resident(head["w_pre"]), resident(head["b_pre"]),
        resident(head["w_cls"]), resident(head["b_cls"]),
    ]
    out_specs = (
        pl.BlockSpec((B * S, H), lambda l: (0, 0)),       # resident carry
        pl.BlockSpec((B, LOGITS_PAD), lambda l: (0, 0)),  # lane-dense logits
    )
    out_shape = (
        jax.ShapeDtypeStruct((B * S, H), jnp.float32),
        jax.ShapeDtypeStruct((B, LOGITS_PAD), jnp.float32),
    )
    return pl.pallas_call(
        fused_encoder_kernel,
        grid=(N_LAYERS,),
        in_specs=in_specs,
        out_specs=out_specs,
        out_shape=out_shape,
        compiler_params=pltpu.CompilerParams(
            # Layer axis carries state -> "arbitrary".  On v7x, prepend a
            # row-tiled "parallel" axis over B*S so the second TensorCore is
            # used (and set vmem_limit_bytes / K,N-tile FFN weights at real
            # H=768 / FFN=3072 scale).
            dimension_semantics=("arbitrary",)),
    )(*inputs)


# ---------------------------------------------------------------------------
# Parameter init (deterministic, synthetic). Weights bf16, biases/LN f32.
# ---------------------------------------------------------------------------
def init_params(key):
    def nrm(k, shape, scale=0.02):
        return scale * jax.random.normal(k, shape, dtype=jnp.float32)

    ks = iter(jax.random.split(key, 16))

    # attention projections as per-head slabs: slab j*NH+h = {q,k,v}[j], head h
    wqkv = nrm(next(ks), (N_LAYERS, 3 * N_HEADS, H, D_HEAD)).astype(jnp.bfloat16)
    wo = nrm(next(ks), (N_LAYERS, H, H)).astype(jnp.bfloat16)
    w1 = nrm(next(ks), (N_LAYERS, H, FFN)).astype(jnp.bfloat16)
    w2 = nrm(next(ks), (N_LAYERS, FFN, H)).astype(jnp.bfloat16)

    bq = nrm(next(ks), (N_LAYERS, H), 0.01)
    bk = nrm(next(ks), (N_LAYERS, H), 0.01)
    bv = nrm(next(ks), (N_LAYERS, H), 0.01)
    bo = nrm(next(ks), (N_LAYERS, H), 0.01)
    b1 = nrm(next(ks), (N_LAYERS, FFN), 0.01)
    b2 = nrm(next(ks), (N_LAYERS, H), 0.01)
    ln1_g = jnp.ones((N_LAYERS, H), jnp.float32)
    ln1_b = jnp.zeros((N_LAYERS, H), jnp.float32)
    ln2_g = jnp.ones((N_LAYERS, H), jnp.float32)
    ln2_b = jnp.zeros((N_LAYERS, H), jnp.float32)

    # pack all small per-layer params into ONE lane-padded (L, 8, 128) tile:
    #   row 0: [bq | bk]          row 1: [bv | bo]       row 2: b1 (FFN=128)
    #   row 3: [b2 | ln1_gamma]   row 4: [ln1_beta | ln2_gamma]
    #   row 5: [ln2_beta | pad]   rows 6-7: pad
    small = jnp.zeros((N_LAYERS, 8, 128), jnp.float32)
    small = small.at[:, 0, 0:H].set(bq).at[:, 0, H:2 * H].set(bk)
    small = small.at[:, 1, 0:H].set(bv).at[:, 1, H:2 * H].set(bo)
    small = small.at[:, 2, 0:FFN].set(b1)
    small = small.at[:, 3, 0:H].set(b2).at[:, 3, H:2 * H].set(ln1_g)
    small = small.at[:, 4, 0:H].set(ln1_b).at[:, 4, H:2 * H].set(ln2_g)
    small = small.at[:, 5, 0:H].set(ln2_b)

    w_cls = jnp.zeros((H, LOGITS_PAD), jnp.float32)
    w_cls = w_cls.at[:, :NUM_CLASSES].set(nrm(next(ks), (H, NUM_CLASSES)))

    return {
        "word_emb": nrm(next(ks), (VOCAB, H)),
        "pos_emb": nrm(next(ks), (MAX_POS, H)),
        "emb_gamma": jnp.ones((1, H), jnp.float32),
        "emb_beta": jnp.zeros((1, H), jnp.float32),
        "enc": {"wqkv": wqkv, "wo": wo, "w1": w1, "w2": w2, "small": small},
        "head": {
            "w_pre": nrm(next(ks), (H, H)).astype(jnp.bfloat16),
            "b_pre": nrm(next(ks), (1, H), 0.01),
            "w_cls": w_cls.astype(jnp.bfloat16),          # lane-padded to 128
            "b_cls": jnp.zeros((1, LOGITS_PAD), jnp.float32),
        },
    }


# ---------------------------------------------------------------------------
# Full forward: mirrors DistilBERTClass.forward -> (logits, cls_embed)
# ---------------------------------------------------------------------------
def distilbert_class_forward(params, input_ids, attention_mask):
    # --- embedding glue (gather + LayerNorm), plain JAX ---------------------
    positions = jnp.arange(S)
    x = params["word_emb"][input_ids] + params["pos_emb"][positions][None]
    x = _layer_norm(x, params["emb_gamma"], params["emb_beta"]).astype(jnp.float32)

    # additive attention-mask bias, pre-folded head-major to (NH*B, S) so the
    # kernel performs exactly one broadcast-add per layer.
    mask_bias = (1.0 - attention_mask.astype(jnp.float32)) * -1e9    # (B, S)
    mask_folded = jnp.tile(mask_bias, (N_HEADS, 1))                  # (NH*B, S)

    # --- one fused Pallas call: all encoder layers + classification head ---
    x_out, logits_pad = encoder_and_head(
        x.reshape(B * S, H), mask_folded, params["enc"], params["head"])

    embed = x_out.reshape(B, S, H)[:, 0, :]          # CLS-token embedding (B, H)
    logits = logits_pad[:, :NUM_CLASSES]             # strip lane padding
    # NOTE: self.softmax is defined in __init__ but NOT applied in forward().
    return logits, embed


if __name__ == "__main__":
    key = jax.random.PRNGKey(0)
    pkey, ikey = jax.random.split(key)

    params = init_params(pkey)
    input_ids = jax.random.randint(ikey, (B, S), 0, VOCAB, dtype=jnp.int32)
    # second sequence has 3 padding positions at the end
    attention_mask = jnp.array(
        [[1] * S,
         [1] * (S - 3) + [0] * 3], dtype=jnp.int32)

    logits, embed = jax.jit(distilbert_class_forward)(params, input_ids, attention_mask)
    jax.block_until_ready((logits, embed))

    assert logits.shape == (B, NUM_CLASSES)
    assert embed.shape == (B, H)
    assert bool(jnp.all(jnp.isfinite(logits))) and bool(jnp.all(jnp.isfinite(embed)))
    print("KERNEL_OK")
</pallas_src>

<mosaic_0001>
module attributes {stable_mosaic.version = 11 : i64} {
  func.func @fused_encoder_kernel(%arg0: i32, %arg1: memref<16x64xf32, #tpu.memory_space<vmem>>, %arg2: memref<4x8xf32, #tpu.memory_space<vmem>>, %arg3: memref<1x6x64x32xbf16, #tpu.memory_space<vmem>>, %arg4: memref<1x64x64xbf16, #tpu.memory_space<vmem>>, %arg5: memref<1x64x128xbf16, #tpu.memory_space<vmem>>, %arg6: memref<1x128x64xbf16, #tpu.memory_space<vmem>>, %arg7: memref<1x8x128xf32, #tpu.memory_space<vmem>>, %arg8: memref<64x64xbf16, #tpu.memory_space<vmem>>, %arg9: memref<1x64xf32, #tpu.memory_space<vmem>>, %arg10: memref<64x128xbf16, #tpu.memory_space<vmem>>, %arg11: memref<1x128xf32, #tpu.memory_space<vmem>>, %arg12: memref<16x64xf32, #tpu.memory_space<vmem>>, %arg13: memref<2x128xf32, #tpu.memory_space<vmem>>) attributes {dimension_semantics = [#tpu.dimension_semantics<arbitrary>], iteration_bounds = array<i64: 2>, scalar_prefetch = 0 : i64, scratch_operands = 0 : i64, tpu.core_type = #tpu.core_type<tc>, window_params = [{pipeline_mode = #tpu.pipeline_mode<synchronous>, transform_indices = @transform_0, window_bounds = array<i64: 16, 64>}, {pipeline_mode = #tpu.pipeline_mode<synchronous>, transform_indices = @transform_1, window_bounds = array<i64: 4, 8>}, {transform_indices = @transform_2, window_bounds = array<i64: 1, 6, 64, 32>}, {transform_indices = @transform_3, window_bounds = array<i64: 1, 64, 64>}, {transform_indices = @transform_4, window_bounds = array<i64: 1, 64, 128>}, {transform_indices = @transform_5, window_bounds = array<i64: 1, 128, 64>}, {transform_indices = @transform_6, window_bounds = array<i64: 1, 8, 128>}, {pipeline_mode = #tpu.pipeline_mode<synchronous>, transform_indices = @transform_7, window_bounds = array<i64: 64, 64>}, {pipeline_mode = #tpu.pipeline_mode<synchronous>, transform_indices = @transform_8, window_bounds = array<i64: 1, 64>}, {pipeline_mode = #tpu.pipeline_mode<synchronous>, transform_indices = @transform_9, window_bounds = array<i64: 64, 128>}, {pipeline_mode = #tpu.pipeline_mode<synchronous>, transform_indices = @transform_10, window_bounds = array<i64: 1, 128>}, {pipeline_mode = #tpu.pipeline_mode<synchronous>, transform_indices = @transform_11, window_bounds = array<i64: 16, 64>}, {pipeline_mode = #tpu.pipeline_mode<synchronous>, transform_indices = @transform_12, window_bounds = array<i64: 2, 128>}]} {
    %c0_i32 = arith.constant 0 : i32
    %0 = arith.cmpi eq, %arg0, %c0_i32 : i32
    %1 = arith.extui %0 : i1 to i32
    %c0_i32_0 = arith.constant 0 : i32
    %2 = arith.cmpi ne, %1, %c0_i32_0 : i32
    scf.if %2 {
      %c0_50 = arith.constant 0 : index
      %c0_51 = arith.constant 0 : index
      %171 = vector.load %arg1[%c0_50, %c0_51] : memref<16x64xf32, #tpu.memory_space<vmem>>, vector<16x64xf32>
      %c0_52 = arith.constant 0 : index
      %c0_53 = arith.constant 0 : index
      %172 = vector.load %arg12[%c0_52, %c0_53] : memref<16x64xf32, #tpu.memory_space<vmem>>, vector<16x64xf32>
      tpu.vector_store %arg12[%c0_52, %c0_53], %171 {strides = array<i32>} : memref<16x64xf32, #tpu.memory_space<vmem>>, vector<16x64xf32>,
    } else {
    }
    %c0 = arith.constant 0 : index
    %c0_1 = arith.constant 0 : index
    %3 = vector.load %arg12[%c0, %c0_1] : memref<16x64xf32, #tpu.memory_space<vmem>>, vector<16x64xf32>
    %4 = arith.truncf %3 : vector<16x64xf32> to vector<16x64xbf16>
    %c0_2 = arith.constant 0 : index
    %c0_3 = arith.constant 0 : index
    %c0_4 = arith.constant 0 : index
    %5 = vector.load %arg7[%c0_2, %c0_3, %c0_4] : memref<1x8x128xf32, #tpu.memory_space<vmem>>, vector<1x8x128xf32>
    %6 = vector.shape_cast %5 : vector<1x8x128xf32> to vector<8x128xf32>
    %7 = vector.extract_strided_slice %6 {offsets = [0, 0], sizes = [1, 64], strides = [1, 1]} : vector<8x128xf32> to vector<1x64xf32>
    %8 = vector.extract_strided_slice %6 {offsets = [0, 64], sizes = [1, 64], strides = [1, 1]} : vector<8x128xf32> to vector<1x64xf32>
    %9 = vector.extract_strided_slice %6 {offsets = [1, 0], sizes = [1, 64], strides = [1, 1]} : vector<8x128xf32> to vector<1x64xf32>
    %10 = vector.extract_strided_slice %6 {offsets = [1, 64], sizes = [1, 64], strides = [1, 1]} : vector<8x128xf32> to vector<1x64xf32>
    %11 = vector.extract_strided_slice %6 {offsets = [2, 0], sizes = [1, 128], strides = [1, 1]} : vector<8x128xf32> to vector<1x128xf32>
    %12 = vector.extract_strided_slice %6 {offsets = [3, 0], sizes = [1, 64], strides = [1, 1]} : vector<8x128xf32> to vector<1x64xf32>
    %13 = vector.extract_strided_slice %6 {offsets = [3, 64], sizes = [1, 64], strides = [1, 1]} : vector<8x128xf32> to vector<1x64xf32>
    %14 = vector.extract_strided_slice %6 {offsets = [4, 0], sizes = [1, 64], strides = [1, 1]} : vector<8x128xf32> to vector<1x64xf32>
    %15 = vector.extract_strided_slice %6 {offsets = [4, 64], sizes = [1, 64], strides = [1, 1]} : vector<8x128xf32> to vector<1x64xf32>
    %16 = vector.extract_strided_slice %6 {offsets = [5, 0], sizes = [1, 64], strides = [1, 1]} : vector<8x128xf32> to vector<1x64xf32>
    %c0_5 = arith.constant 0 : index
    %c0_6 = arith.constant 0 : index
    %c0_7 = arith.constant 0 : index
    %c0_8 = arith.constant 0 : index
    %17 = vector.load %arg3[%c0_5, %c0_6, %c0_7, %c0_8] : memref<1x6x64x32xbf16, #tpu.memory_space<vmem>>, vector<1x6x64x32xbf16>
    %18 = vector.shape_cast %17 : vector<1x6x64x32xbf16> to vector<6x64x32xbf16>
    %19 = vector.extract_strided_slice %18 {offsets = [0, 0, 0], sizes = [1, 64, 32], strides = [1, 1, 1]} : vector<6x64x32xbf16> to vector<1x64x32xbf16>
    %20 = vector.shape_cast %19 : vector<1x64x32xbf16> to vector<64x32xbf16>
    %cst = arith.constant dense<0.000000e+00> : vector<16x32xf32>
    %21 = tpu.matmul %4, %20, %cst {dimension_numbers = #tpu.dot_dimension_numbers<[1], [0], [0], [1], [0, 0, 1, 1], [], []>} : vector<16x64xbf16>, vector<64x32xbf16>, vector<16x32xf32> -> vector<16x32xf32>
    %22 = vector.extract_strided_slice %7 {offsets = [0, 0], sizes = [1, 32], strides = [1, 1]} : vector<1x64xf32> to vector<1x32xf32>
    %23 = vector.broadcast %22 : vector<1x32xf32> to vector<16x32xf32>
    %24 = arith.addf %21, %23 : vector<16x32xf32>
    %25 = vector.extract_strided_slice %18 {offsets = [2, 0, 0], sizes = [1, 64, 32], strides = [1, 1, 1]} : vector<6x64x32xbf16> to vector<1x64x32xbf16>
    %26 = vector.shape_cast %25 : vector<1x64x32xbf16> to vector<64x32xbf16>
    %cst_9 = arith.constant dense<0.000000e+00> : vector<16x32xf32>
    %27 = tpu.matmul %4, %26, %cst_9 {dimension_numbers = #tpu.dot_dimension_numbers<[1], [0], [0], [1], [0, 0, 1, 1], [], []>} : vector<16x64xbf16>, vector<64x32xbf16>, vector<16x32xf32> -> vector<16x32xf32>
    %28 = vector.extract_strided_slice %8 {offsets = [0, 0], sizes = [1, 32], strides = [1, 1]} : vector<1x64xf32> to vector<1x32xf32>
    %29 = vector.broadcast %28 : vector<1x32xf32> to vector<16x32xf32>
    %30 = arith.addf %27, %29 : vector<16x32xf32>
    %31 = vector.extract_strided_slice %18 {offsets = [4, 0, 0], sizes = [1, 64, 32], strides = [1, 1, 1]} : vector<6x64x32xbf16> to vector<1x64x32xbf16>
    %32 = vector.shape_cast %31 : vector<1x64x32xbf16> to vector<64x32xbf16>
    %cst_10 = arith.constant dense<0.000000e+00> : vector<16x32xf32>
    %33 = tpu.matmul %4, %32, %cst_10 {dimension_numbers = #tpu.dot_dimension_numbers<[1], [0], [0], [1], [0, 0, 1, 1], [], []>} : vector<16x64xbf16>, vector<64x32xbf16>, vector<16x32xf32> -> vector<16x32xf32>
    %34 = vector.extract_strided_slice %9 {offsets = [0, 0], sizes = [1, 32], strides = [1, 1]} : vector<1x64xf32> to vector<1x32xf32>
    %35 = vector.broadcast %34 : vector<1x32xf32> to vector<16x32xf32>
    %36 = arith.addf %33, %35 : vector<16x32xf32>
    %37 = vector.shape_cast %24 : vector<16x32xf32> to vector<2x8x32xf32>
    %38 = vector.shape_cast %30 : vector<16x32xf32> to vector<2x8x32xf32>
    %39 = vector.shape_cast %36 : vector<16x32xf32> to vector<2x8x32xf32>
    %40 = vector.extract_strided_slice %18 {offsets = [1, 0, 0], sizes = [1, 64, 32], strides = [1, 1, 1]} : vector<6x64x32xbf16> to vector<1x64x32xbf16>
    %41 = vector.shape_cast %40 : vector<1x64x32xbf16> to vector<64x32xbf16>
    %cst_11 = arith.constant dense<0.000000e+00> : vector<16x32xf32>
    %42 = tpu.matmul %4, %41, %cst_11 {dimension_numbers = #tpu.dot_dimension_numbers<[1], [0], [0], [1], [0, 0, 1, 1], [], []>} : vector<16x64xbf16>, vector<64x32xbf16>, vector<16x32xf32> -> vector<16x32xf32>
    %43 = vector.extract_strided_slice %7 {offsets = [0, 32], sizes = [1, 32], strides = [1, 1]} : vector<1x64xf32> to vector<1x32xf32>
    %44 = vector.broadcast %43 : vector<1x32xf32> to vector<16x32xf32>
    %45 = arith.addf %42, %44 : vector<16x32xf32>
    %46 = vector.extract_strided_slice %18 {offsets = [3, 0, 0], sizes = [1, 64, 32], strides = [1, 1, 1]} : vector<6x64x32xbf16> to vector<1x64x32xbf16>
    %47 = vector.shape_cast %46 : vector<1x64x32xbf16> to vector<64x32xbf16>
    %cst_12 = arith.constant dense<0.000000e+00> : vector<16x32xf32>
    %48 = tpu.matmul %4, %47, %cst_12 {dimension_numbers = #tpu.dot_dimension_numbers<[1], [0], [0], [1], [0, 0, 1, 1], [], []>} : vector<16x64xbf16>, vector<64x32xbf16>, vector<16x32xf32> -> vector<16x32xf32>
    %49 = vector.extract_strided_slice %8 {offsets = [0, 32], sizes = [1, 32], strides = [1, 1]} : vector<1x64xf32> to vector<1x32xf32>
    %50 = vector.broadcast %49 : vector<1x32xf32> to vector<16x32xf32>
    %51 = arith.addf %48, %50 : vector<16x32xf32>
    %52 = vector.extract_strided_slice %18 {offsets = [5, 0, 0], sizes = [1, 64, 32], strides = [1, 1, 1]} : vector<6x64x32xbf16> to vector<1x64x32xbf16>
    %53 = vector.shape_cast %52 : vector<1x64x32xbf16> to vector<64x32xbf16>
    %cst_13 = arith.constant dense<0.000000e+00> : vector<16x32xf32>
    %54 = tpu.matmul %4, %53, %cst_13 {dimension_numbers = #tpu.dot_dimension_numbers<[1], [0], [0], [1], [0, 0, 1, 1], [], []>} : vector<16x64xbf16>, vector<64x32xbf16>, vector<16x32xf32> -> vector<16x32xf32>
    %55 = vector.extract_strided_slice %9 {offsets = [0, 32], sizes = [1, 32], strides = [1, 1]} : vector<1x64xf32> to vector<1x32xf32>
    %56 = vector.broadcast %55 : vector<1x32xf32> to vector<16x32xf32>
    %57 = arith.addf %54, %56 : vector<16x32xf32>
    %58 = vector.shape_cast %45 : vector<16x32xf32> to vector<2x8x32xf32>
    %59 = vector.shape_cast %51 : vector<16x32xf32> to vector<2x8x32xf32>
    %60 = vector.shape_cast %57 : vector<16x32xf32> to vector<2x8x32xf32>
    %61 = tpu.concatenate %37, %58 in 0 : vector<2x8x32xf32>, vector<2x8x32xf32> -> vector<4x8x32xf32>
    %62 = arith.truncf %61 : vector<4x8x32xf32> to vector<4x8x32xbf16>
    %63 = tpu.concatenate %38, %59 in 0 : vector<2x8x32xf32>, vector<2x8x32xf32> -> vector<4x8x32xf32>
    %64 = arith.truncf %63 : vector<4x8x32xf32> to vector<4x8x32xbf16>
    %65 = tpu.concatenate %39, %60 in 0 : vector<2x8x32xf32>, vector<2x8x32xf32> -> vector<4x8x32xf32>
    %66 = arith.truncf %65 : vector<4x8x32xf32> to vector<4x8x32xbf16>
    "tpu.trace_start"() <{level = 10 : i32, message = "Bqd,Bkd->Bqk"}> : () -> ()
    %cst_14 = arith.constant dense<0.000000e+00> : vector<4x8x8xf32>
    %67 = tpu.matmul %62, %64, %cst_14 {dimension_numbers = #tpu.dot_dimension_numbers<[2], [2], [1], [1], [0, 0, 0, 1, 1, 1], [0], [0]>} : vector<4x8x32xbf16>, vector<4x8x32xbf16>, vector<4x8x8xf32> -> vector<4x8x8xf32>
    "tpu.trace_stop"() : () -> ()
    %cst_15 = arith.constant 0.176776692 : f32
    %68 = vector.broadcast %cst_15 : f32 to vector<4x8x8xf32>
    %69 = arith.mulf %67, %68 : vector<4x8x8xf32>
    %c0_16 = arith.constant 0 : index
    %c0_17 = arith.constant 0 : index
    %70 = vector.load %arg2[%c0_16, %c0_17] : memref<4x8xf32, #tpu.memory_space<vmem>>, vector<4x8xf32>
    %71 = vector.shape_cast %70 : vector<4x8xf32> to vector<4x1x8xf32>
    %72 = vector.broadcast %71 : vector<4x1x8xf32> to vector<4x8x8xf32>
    %73 = arith.addf %69, %72 : vector<4x8x8xf32>
    %cst_18 = arith.constant dense<0xFF800000> : vector<4x8xf32>
    %74 = vector.multi_reduction <maximumf>, %73, %cst_18 [2] : vector<4x8x8xf32> to vector<4x8xf32>
    %75 = vector.shape_cast %74 : vector<4x8xf32> to vector<4x8x1xf32>
    %76 = vector.broadcast %75 : vector<4x8x1xf32> to vector<4x8x8xf32>
    %77 = arith.subf %73, %76 : vector<4x8x8xf32>
    %78 = math.exp %77 : vector<4x8x8xf32>
    %cst_19 = arith.constant dense<0.000000e+00> : vector<4x8xf32>
    %79 = vector.multi_reduction <add>, %78, %cst_19 [2] : vector<4x8x8xf32> to vector<4x8xf32>
    %80 = vector.shape_cast %79 : vector<4x8xf32> to vector<4x8x1xf32>
    %81 = tpu.reciprocal %80 {approx = true} : vector<4x8x1xf32> -> vector<4x8x1xf32>
    %82 = vector.broadcast %81 : vector<4x8x1xf32> to vector<4x8x8xf32>
    %83 = arith.mulf %78, %82 : vector<4x8x8xf32>
    %84 = arith.truncf %83 : vector<4x8x8xf32> to vector<4x8x8xbf16>
    "tpu.trace_start"() <{level = 10 : i32, message = "Bqk,Bkd->Bqd"}> : () -> ()
    %cst_20 = arith.constant dense<0.000000e+00> : vector<4x8x32xf32>
    %85 = tpu.matmul %84, %66, %cst_20 {dimension_numbers = #tpu.dot_dimension_numbers<[2], [1], [1], [2], [0, 0, 0, 1, 1, 2], [0], [0]>} : vector<4x8x8xbf16>, vector<4x8x32xbf16>, vector<4x8x32xf32> -> vector<4x8x32xf32>
    "tpu.trace_stop"() : () -> ()
    %86 = vector.extract_strided_slice %85 {offsets = [0, 0, 0], sizes = [2, 8, 32], strides = [1, 1, 1]} : vector<4x8x32xf32> to vector<2x8x32xf32>
    %87 = vector.extract_strided_slice %85 {offsets = [2, 0, 0], sizes = [2, 8, 32], strides = [1, 1, 1]} : vector<4x8x32xf32> to vector<2x8x32xf32>
    %88 = tpu.concatenate %86, %87 in 2 : vector<2x8x32xf32>, vector<2x8x32xf32> -> vector<2x8x64xf32>
    %89 = vector.shape_cast %88 : vector<2x8x64xf32> to vector<16x64xf32>
    %90 = arith.truncf %89 : vector<16x64xf32> to vector<16x64xbf16>
    %c0_21 = arith.constant 0 : index
    %c0_22 = arith.constant 0 : index
    %c0_23 = arith.constant 0 : index
    %91 = vector.load %arg4[%c0_21, %c0_22, %c0_23] : memref<1x64x64xbf16, #tpu.memory_space<vmem>>, vector<1x64x64xbf16>
    %92 = vector.shape_cast %91 : vector<1x64x64xbf16> to vector<64x64xbf16>
    %cst_24 = arith.constant dense<0.000000e+00> : vector<16x64xf32>
    %93 = tpu.matmul %90, %92, %cst_24 {dimension_numbers = #tpu.dot_dimension_numbers<[1], [0], [0], [1], [0, 0, 1, 1], [], []>} : vector<16x64xbf16>, vector<64x64xbf16>, vector<16x64xf32> -> vector<16x64xf32>
    %94 = vector.broadcast %10 : vector<1x64xf32> to vector<16x64xf32>
    %95 = arith.addf %93, %94 : vector<16x64xf32>
    %96 = arith.addf %3, %95 : vector<16x64xf32>
    %cst_25 = arith.constant dense<0.000000e+00> : vector<16xf32>
    %97 = vector.multi_reduction <add>, %96, %cst_25 [1] : vector<16x64xf32> to vector<16xf32>
    %98 = vector.shape_cast %97 : vector<16xf32> to vector<16x1xf32>
    %cst_26 = arith.constant 6.400000e+01 : f32
    %99 = vector.broadcast %cst_26 : f32 to vector<16x1xf32>
    %100 = arith.divf %98, %99 : vector<16x1xf32>
    %101 = vector.broadcast %100 : vector<16x1xf32> to vector<16x64xf32>
    %102 = arith.subf %96, %101 : vector<16x64xf32>
    %103 = arith.mulf %102, %102 : vector<16x64xf32>
    %cst_27 = arith.constant dense<0.000000e+00> : vector<16xf32>
    %104 = vector.multi_reduction <add>, %103, %cst_27 [1] : vector<16x64xf32> to vector<16xf32>
    %105 = vector.shape_cast %104 : vector<16xf32> to vector<16x1xf32>
    %cst_28 = arith.constant 6.400000e+01 : f32
    %106 = vector.broadcast %cst_28 : f32 to vector<16x1xf32>
    %107 = arith.divf %105, %106 : vector<16x1xf32>
    %108 = vector.broadcast %100 : vector<16x1xf32> to vector<16x64xf32>
    %109 = arith.subf %96, %108 : vector<16x64xf32>
    %cst_29 = arith.constant 9.99999996E-13 : f32
    %110 = vector.broadcast %cst_29 : f32 to vector<16x1xf32>
    %111 = arith.addf %107, %110 : vector<16x1xf32>
    %112 = math.rsqrt %111 : vector<16x1xf32>
    %113 = vector.broadcast %112 : vector<16x1xf32> to vector<16x64xf32>
    %114 = arith.mulf %109, %113 : vector<16x64xf32>
    %115 = vector.broadcast %13 : vector<1x64xf32> to vector<16x64xf32>
    %116 = arith.mulf %114, %115 : vector<16x64xf32>
    %117 = vector.broadcast %14 : vector<1x64xf32> to vector<16x64xf32>
    %118 = arith.addf %116, %117 : vector<16x64xf32>
    %119 = arith.truncf %118 : vector<16x64xf32> to vector<16x64xbf16>
    %c0_30 = arith.constant 0 : index
    %c0_31 = arith.constant 0 : index
    %c0_32 = arith.constant 0 : index
    %120 = vector.load %arg5[%c0_30, %c0_31, %c0_32] : memref<1x64x128xbf16, #tpu.memory_space<vmem>>, vector<1x64x128xbf16>
    %121 = vector.shape_cast %120 : vector<1x64x128xbf16> to vector<64x128xbf16>
    %cst_33 = arith.constant dense<0.000000e+00> : vector<16x128xf32>
    %122 = tpu.matmul %119, %121, %cst_33 {dimension_numbers = #tpu.dot_dimension_numbers<[1], [0], [0], [1], [0, 0, 1, 1], [], []>} : vector<16x64xbf16>, vector<64x128xbf16>, vector<16x128xf32> -> vector<16x128xf32>
    %123 = vector.broadcast %11 : vector<1x128xf32> to vector<16x128xf32>
    %124 = arith.addf %122, %123 : vector<16x128xf32>
    %125 = arith.mulf %124, %124 : vector<16x128xf32>
    %126 = arith.mulf %124, %125 : vector<16x128xf32>
    %cst_34 = arith.constant 4.471500e-02 : f32
    %127 = vector.broadcast %cst_34 : f32 to vector<16x128xf32>
    %128 = arith.mulf %127, %126 : vector<16x128xf32>
    %129 = arith.addf %124, %128 : vector<16x128xf32>
    %cst_35 = arith.constant 0.797884583 : f32
    %130 = vector.broadcast %cst_35 : f32 to vector<16x128xf32>
    %131 = arith.mulf %130, %129 : vector<16x128xf32>
    %132 = math.tanh %131 : vector<16x128xf32>
    %cst_36 = arith.constant 1.000000e+00 : f32
    %133 = vector.broadcast %cst_36 : f32 to vector<16x128xf32>
    %134 = arith.addf %133, %132 : vector<16x128xf32>
    %cst_37 = arith.constant 5.000000e-01 : f32
    %135 = vector.broadcast %cst_37 : f32 to vector<16x128xf32>
    %136 = arith.mulf %135, %134 : vector<16x128xf32>
    %137 = arith.mulf %124, %136 : vector<16x128xf32>
    %138 = arith.truncf %137 : vector<16x128xf32> to vector<16x128xbf16>
    %c0_38 = arith.constant 0 : index
    %c0_39 = arith.constant 0 : index
    %c0_40 = arith.constant 0 : index
    %139 = vector.load %arg6[%c0_38, %c0_39, %c0_40] : memref<1x128x64xbf16, #tpu.memory_space<vmem>>, vector<1x128x64xbf16>
    %140 = vector.shape_cast %139 : vector<1x128x64xbf16> to vector<128x64xbf16>
    %cst_41 = arith.constant dense<0.000000e+00> : vector<16x64xf32>
    %141 = tpu.matmul %138, %140, %cst_41 {dimension_numbers = #tpu.dot_dimension_numbers<[1], [0], [0], [1], [0, 0, 1, 1], [], []>} : vector<16x128xbf16>, vector<128x64xbf16>, vector<16x64xf32> -> vector<16x64xf32>
    %142 = vector.broadcast %12 : vector<1x64xf32> to vector<16x64xf32>
    %143 = arith.addf %141, %142 : vector<16x64xf32>
    %144 = arith.addf %118, %143 : vector<16x64xf32>
    %cst_42 = arith.constant dense<0.000000e+00> : vector<16xf32>
    %145 = vector.multi_reduction <add>, %144, %cst_42 [1] : vector<16x64xf32> to vector<16xf32>
    %146 = vector.shape_cast %145 : vector<16xf32> to vector<16x1xf32>
    %cst_43 = arith.constant 6.400000e+01 : f32
    %147 = vector.broadcast %cst_43 : f32 to vector<16x1xf32>
    %148 = arith.divf %146, %147 : vector<16x1xf32>
    %149 = vector.broadcast %148 : vector<16x1xf32> to vector<16x64xf32>
    %150 = arith.subf %144, %149 : vector<16x64xf32>
    %151 = arith.mulf %150, %150 : vector<16x64xf32>
    %cst_44 = arith.constant dense<0.000000e+00> : vector<16xf32>
    %152 = vector.multi_reduction <add>, %151, %cst_44 [1] : vector<16x64xf32> to vector<16xf32>
    %153 = vector.shape_cast %152 : vector<16xf32> to vector<16x1xf32>
    %cst_45 = arith.constant 6.400000e+01 : f32
    %154 = vector.broadcast %cst_45 : f32 to vector<16x1xf32>
    %155 = arith.divf %153, %154 : vector<16x1xf32>
    %156 = vector.broadcast %148 : vector<16x1xf32> to vector<16x64xf32>
    %157 = arith.subf %144, %156 : vector<16x64xf32>
    %cst_46 = arith.constant 9.99999996E-13 : f32
    %158 = vector.broadcast %cst_46 : f32 to vector<16x1xf32>
    %159 = arith.addf %155, %158 : vector<16x1xf32>
    %160 = math.rsqrt %159 : vector<16x1xf32>
    %161 = vector.broadcast %160 : vector<16x1xf32> to vector<16x64xf32>
    %162 = arith.mulf %157, %161 : vector<16x64xf32>
    %163 = vector.broadcast %15 : vector<1x64xf32> to vector<16x64xf32>
    %164 = arith.mulf %162, %163 : vector<16x64xf32>
    %165 = vector.broadcast %16 : vector<1x64xf32> to vector<16x64xf32>
    %166 = arith.addf %164, %165 : vector<16x64xf32>
    %c0_47 = arith.constant 0 : index
    %c0_48 = arith.constant 0 : index
    %167 = vector.load %arg12[%c0_47, %c0_48] : memref<16x64xf32, #tpu.memory_space<vmem>>, vector<16x64xf32>
    tpu.vector_store %arg12[%c0_47, %c0_48], %166 {strides = array<i32>} : memref<16x64xf32, #tpu.memory_space<vmem>>, vector<16x64xf32>,
    %c1_i32 = arith.constant 1 : i32
    %168 = arith.cmpi eq, %arg0, %c1_i32 : i32
    %169 = arith.extui %168 : i1 to i32
    %c0_i32_49 = arith.constant 0 : i32
    %170 = arith.cmpi ne, %169, %c0_i32_49 : i32
    scf.if %170 {
      %171 = vector.shape_cast %166 : vector<16x64xf32> to vector<2x8x64xf32>
      %172 = vector.extract_strided_slice %171 {offsets = [0, 0, 0], sizes = [2, 1, 64], strides = [1, 1, 1]} : vector<2x8x64xf32> to vector<2x1x64xf32>
      %173 = vector.shape_cast %172 : vector<2x1x64xf32> to vector<2x64xf32>
      %174 = arith.truncf %173 : vector<2x64xf32> to vector<2x64xbf16>
      %c0_50 = arith.constant 0 : index
      %c0_51 = arith.constant 0 : index
      %175 = vector.load %arg8[%c0_50, %c0_51] : memref<64x64xbf16, #tpu.memory_space<vmem>>, vector<64x64xbf16>
      %cst_52 = arith.constant dense<0.000000e+00> : vector<2x64xf32>
      %176 = tpu.matmul %174, %175, %cst_52 {dimension_numbers = #tpu.dot_dimension_numbers<[1], [0], [0], [1], [0, 0, 1, 1], [], []>} : vector<2x64xbf16>, vector<64x64xbf16>, vector<2x64xf32> -> vector<2x64xf32>
      %c0_53 = arith.constant 0 : index
      %c0_54 = arith.constant 0 : index
      %177 = vector.load %arg9[%c0_53, %c0_54] : memref<1x64xf32, #tpu.memory_space<vmem>>, vector<1x64xf32>
      %178 = vector.broadcast %177 : vector<1x64xf32> to vector<2x64xf32>
      %179 = arith.addf %176, %178 : vector<2x64xf32>
      %cst_55 = arith.constant 0.000000e+00 : f32
      %180 = vector.broadcast %cst_55 : f32 to vector<2x64xf32>
      %181 = arith.maximumf %179, %180 : vector<2x64xf32>
      %182 = arith.truncf %181 : vector<2x64xf32> to vector<2x64xbf16>
      %c0_56 = arith.constant 0 : index
      %c0_57 = arith.constant 0 : index
      %183 = vector.load %arg10[%c0_56, %c0_57] : memref<64x128xbf16, #tpu.memory_space<vmem>>, vector<64x128xbf16>
      %cst_58 = arith.constant dense<0.000000e+00> : vector<2x128xf32>
      %184 = tpu.matmul %182, %183, %cst_58 {dimension_numbers = #tpu.dot_dimension_numbers<[1], [0], [0], [1], [0, 0, 1, 1], [], []>} : vector<2x64xbf16>, vector<64x128xbf16>, vector<2x128xf32> -> vector<2x128xf32>
      %c0_59 = arith.constant 0 : index
      %c0_60 = arith.constant 0 : index
      %185 = vector.load %arg11[%c0_59, %c0_60] : memref<1x128xf32, #tpu.memory_space<vmem>>, vector<1x128xf32>
      %186 = vector.broadcast %185 : vector<1x128xf32> to vector<2x128xf32>
      %187 = arith.addf %184, %186 : vector<2x128xf32>
      %c0_61 = arith.constant 0 : index
      %c0_62 = arith.constant 0 : index
      %188 = vector.load %arg13[%c0_61, %c0_62] : memref<2x128xf32, #tpu.memory_space<vmem>>, vector<2x128xf32>
      tpu.vector_store %arg13[%c0_61, %c0_62], %187 {strides = array<i32>} : memref<2x128xf32, #tpu.memory_space<vmem>>, vector<2x128xf32>,
    } else {
    }
    return
  }
  func.func @transform_0(%arg0: i32) -> (i32, i32) {
    %c0_i32 = arith.constant 0 : i32
    %c0_i32_0 = arith.constant 0 : i32
    %c0_i32_1 = arith.constant 0 : i32
    return %c0_i32, %c0_i32_0 : i32, i32
  }
  func.func @transform_1(%arg0: i32) -> (i32, i32) {
    %c0_i32 = arith.constant 0 : i32
    %c0_i32_0 = arith.constant 0 : i32
    %c0_i32_1 = arith.constant 0 : i32
    return %c0_i32, %c0_i32_0 : i32, i32
  }
  func.func @transform_2(%arg0: i32) -> (i32, i32, i32, i32) {
    %c0_i32 = arith.constant 0 : i32
    %c0_i32_0 = arith.constant 0 : i32
    %c0_i32_1 = arith.constant 0 : i32
    %c0_i32_2 = arith.constant 0 : i32
    return %arg0, %c0_i32, %c0_i32_0, %c0_i32_1 : i32, i32, i32, i32
  }
  func.func @transform_3(%arg0: i32) -> (i32, i32, i32) {
    %c0_i32 = arith.constant 0 : i32
    %c0_i32_0 = arith.constant 0 : i32
    %c0_i32_1 = arith.constant 0 : i32
    return %arg0, %c0_i32, %c0_i32_0 : i32, i32, i32
  }
  func.func @transform_4(%arg0: i32) -> (i32, i32, i32) {
    %c0_i32 = arith.constant 0 : i32
    %c0_i32_0 = arith.constant 0 : i32
    %c0_i32_1 = arith.constant 0 : i32
    return %arg0, %c0_i32, %c0_i32_0 : i32, i32, i32
  }
  func.func @transform_5(%arg0: i32) -> (i32, i32, i32) {
    %c0_i32 = arith.constant 0 : i32
    %c0_i32_0 = arith.constant 0 : i32
    %c0_i32_1 = arith.constant 0 : i32
    return %arg0, %c0_i32, %c0_i32_0 : i32, i32, i32
  }
  func.func @transform_6(%arg0: i32) -> (i32, i32, i32) {
    %c0_i32 = arith.constant 0 : i32
    %c0_i32_0 = arith.constant 0 : i32
    %c0_i32_1 = arith.constant 0 : i32
    return %arg0, %c0_i32, %c0_i32_0 : i32, i32, i32
  }
  func.func @transform_7(%arg0: i32) -> (i32, i32) {
    %c0_i32 = arith.constant 0 : i32
    %c0_i32_0 = arith.constant 0 : i32
    %c0_i32_1 = arith.constant 0 : i32
    return %c0_i32, %c0_i32_0 : i32, i32
  }
  func.func @transform_8(%arg0: i32) -> (i32, i32) {
    %c0_i32 = arith.constant 0 : i32
    %c0_i32_0 = arith.constant 0 : i32
    %c0_i32_1 = arith.constant 0 : i32
    return %c0_i32, %c0_i32_0 : i32, i32
  }
  func.func @transform_9(%arg0: i32) -> (i32, i32) {
    %c0_i32 = arith.constant 0 : i32
    %c0_i32_0 = arith.constant 0 : i32
    %c0_i32_1 = arith.constant 0 : i32
    return %c0_i32, %c0_i32_0 : i32, i32
  }
  func.func @transform_10(%arg0: i32) -> (i32, i32) {
    %c0_i32 = arith.constant 0 : i32
    %c0_i32_0 = arith.constant 0 : i32
    %c0_i32_1 = arith.constant 0 : i32
    return %c0_i32, %c0_i32_0 : i32, i32
  }
  func.func @transform_11(%arg0: i32) -> (i32, i32) {
    %c0_i32 = arith.constant 0 : i32
    %c0_i32_0 = arith.constant 0 : i32
    %c0_i32_1 = arith.constant 0 : i32
    return %c0_i32, %c0_i32_0 : i32, i32
  }
  func.func @transform_12(%arg0: i32) -> (i32, i32) {
    %c0_i32 = arith.constant 0 : i32
    %c0_i32_0 = arith.constant 0 : i32
    %c0_i32_1 = arith.constant 0 : i32
    return %c0_i32, %c0_i32_0 : i32, i32
  }
}

</mosaic_0001>

<llo_original>
// kernel: distilbert_class_forward.1
$region0: #{distilbert_class_forward.1}
  #allocation0 [shape = 'u32[]', space=smem, size = 0x4, offset = 0x4, fixed_abs, tag = 'smem constant byte address 0x4 - core index']
  #allocation1 [shape = 'u32[144,128]{1,0:T(1,128)}', space=vmem, size = 0x12000, scoped, tag = 'internal scratch']
  %s0 = inlined_call_operand.vmem [shape: f32[16,64], index: 0, kind: input, shape index: {}]
  %s1 = inlined_call_operand.vmem [shape: f32[4,8], index: 1, kind: input, shape index: {}]
  %s2 = inlined_call_operand.vmem [shape: bf16[2,6,64,32], index: 2, kind: input, shape index: {}]
  %s3 = inlined_call_operand.vmem [shape: bf16[2,64,64], index: 3, kind: input, shape index: {}]
  %s4 = inlined_call_operand.vmem [shape: bf16[2,64,128], index: 4, kind: input, shape index: {}]
  %s5 = inlined_call_operand.vmem [shape: bf16[2,128,64], index: 5, kind: input, shape index: {}]
  %s6 = inlined_call_operand.vmem [shape: f32[2,8,128], index: 6, kind: input, shape index: {}]
  %s7 = inlined_call_operand.vmem [shape: bf16[64,64], index: 7, kind: input, shape index: {}]
  %s8 = inlined_call_operand.vmem [shape: f32[1,64], index: 8, kind: input, shape index: {}]
  %s9 = inlined_call_operand.vmem [shape: bf16[64,128], index: 9, kind: input, shape index: {}]
  %s10 = inlined_call_operand.vmem [shape: f32[1,128], index: 10, kind: input, shape index: {}]
  %s11 = inlined_call_operand.vmem [shape: f32[16,64], index: 11, kind: output, shape index: {0}]
  %s12 = inlined_call_operand.hbm [shape: f32[2,128], index: 12, kind: output, shape index: {1}]
  %13 = xla_tuple %s11, %s12
  %s14 = sld [smem:[#allocation0]]
  $region93: #{distilbert_class_forward.1} parent=0
    _
  %s16 = ssub.s32 1, %s14
  %s17 = scalar_select 0, %s16, %s14
  $region1: #{distilbert_class_forward.1} parent=0
    #allocation2 [shape = 'u8[1024]{0}', space=vmem, size = 0x400, scoped, tag = 'output window, operand 1, single buffered']
    #allocation3 [shape = 's32[2]{0}', space=sflag, size = 0x8, scoped, tag = 'scoped memory for distilbert_class_forward.1']
    %18 = vsyncpa [#allocation3], 0
    loop: start=0, step=1, limit=4
    $region2: #{distilbert_class_forward.1} parent=1 // loop_pre_header
      _
    $region3: #{distilbert_class_forward.1} parent=1 // loop_header
      %s20 = sphi 0, %s24
      %p21 = scmp.ge.s32.totalorder %s20, 4
      %s28 = sphi 0, %s28
      %s30 = sphi 0, %s28
      %s31 = sphi 0, %s30
      %s45 = sphi 0, %s31
      %s49 = sphi 0, %s49
      %s51 = sphi 0, %s49
      %s52 = sphi 0, %s51
      %s66 = sphi 0, %s52
      %s72 = sphi 0, %s74
      %s75 = sphi 0, %s72
      %s76 = sphi 0, %s75
      %s92 = sphi 0, %s76
      %s98 = sphi 0, %s100
      %s101 = sphi 0, %s98
      %s102 = sphi 0, %s101
      %s118 = sphi 0, %s102
      %s124 = sphi 0, %s126
      %s127 = sphi 0, %s124
      %s128 = sphi 0, %s127
      %s144 = sphi 0, %s128
      %s150 = sphi 0, %s152
      %s153 = sphi 0, %s150
      %s154 = sphi 0, %s153
      %s170 = sphi 0, %s154
      %s176 = sphi 0, %s178
      %s179 = sphi 0, %s176
      %s180 = sphi 0, %s179
      %s196 = sphi 0, %s180
      %s200 = sphi 0, %s200
      %s202 = sphi 0, %s200
      %s203 = sphi 0, %s202
      %s217 = sphi 0, %s203
      %s221 = sphi 0, %s221
      %s223 = sphi 0, %s221
      %s224 = sphi 0, %s223
      %s238 = sphi 0, %s224
      %s242 = sphi 0, %s242
      %s244 = sphi 0, %s242
      %s245 = sphi 0, %s244
      %s259 = sphi 0, %s245
      %s263 = sphi 0, %s263
      %s265 = sphi 0, %s263
      %s266 = sphi 0, %s265
      %s280 = sphi 0, %s266
      %s284 = sphi 0, %s284
      %s286 = sphi 0, %s284
      %s287 = sphi 0, %s286
      %s301 = sphi 0, %s287
      %s305 = sphi 0, %s305
      %s307 = sphi 0, %s305
      %s308 = sphi 0, %s307
      %s322 = sphi 0, %s308
    $region4: #{distilbert_class_forward.1} parent=1 // loop_header_branch
      %23 = sbr.rel (%p21) target = $region8
    $region5: #{distilbert_class_forward.1} parent=1 // loop_body
      %s25 = ssub.s32 %s20, 1
      %s26 = ssub.s32 %s20, 2
      %s27 = sadd.s32 %s20, 1
      %s29 = sadd.s32 %s28, 1
      %p32 = scmp.eq.s32.totalorder %s20, 1
      %p33 = scmp.ne.s32.totalorder %s28, %s30
      %p34 = scmp.eq.s32.totalorder %s20, 0
      %p35 = por %p33, %p34
      %p36 = scmp.ne.s32.totalorder %s28, %s30
      %p37 = scmp.eq.s32.totalorder %s25, 1
      %p38 = por %p36, %p37
      %p39 = scmp.ne.s32.totalorder %s30, %s31
      %p40 = scmp.eq.s32.totalorder %s25, 0
      %p41 = por %p39, %p40
      %p42 = scmp.ne.s32.totalorder %s30, %s31
      %p43 = scmp.eq.s32.totalorder %s26, 1
      %p44 = por %p42, %p43
      %p46 = scmp.ne.s32.totalorder %s31, %s45
      %p47 = scmp.eq.s32.totalorder %s26, 0
      %p48 = por %p46, %p47
      %s50 = sadd.s32 %s49, 1
      %p53 = scmp.eq.s32.totalorder %s20, 1
      %p54 = scmp.ne.s32.totalorder %s49, %s51
      %p55 = scmp.eq.s32.totalorder %s20, 0
      %p56 = por %p54, %p55
      %p57 = scmp.ne.s32.totalorder %s49, %s51
      %p58 = scmp.eq.s32.totalorder %s25, 1
      %p59 = por %p57, %p58
      %p60 = scmp.ne.s32.totalorder %s51, %s52
      %p61 = scmp.eq.s32.totalorder %s25, 0
      %p62 = por %p60, %p61
      %p63 = scmp.ne.s32.totalorder %s51, %s52
      %p64 = scmp.eq.s32.totalorder %s26, 1
      %p65 = por %p63, %p64
      %p67 = scmp.ne.s32.totalorder %s52, %s66
      %p68 = scmp.eq.s32.totalorder %s26, 0
      %p69 = por %p67, %p68
      %s70 = ssub.s32 %s20, %s27
      %p71 = scmp.eq.s32.totalorder %s70, 0
      %s73 = sadd.s32 %s72, 1
      %s74 = scalar_select %p71, %s72, %s73
      %p77 = pneg %p71
      %p78 = scmp.eq.s32.totalorder %s20, 1
      %p79 = por %p77, %p78
      %p80 = scmp.ne.s32.totalorder %s72, %s75
      %p81 = scmp.eq.s32.totalorder %s20, 0
      %p82 = por %p80, %p81
      %p83 = scmp.ne.s32.totalorder %s72, %s75
      %p84 = scmp.eq.s32.totalorder %s25, 1
      %p85 = por %p83, %p84
      %p86 = scmp.ne.s32.totalorder %s75, %s76
      %p87 = scmp.eq.s32.totalorder %s25, 0
      %p88 = por %p86, %p87
      %p89 = scmp.ne.s32.totalorder %s75, %s76
      %p90 = scmp.eq.s32.totalorder %s26, 1
      %p91 = por %p89, %p90
      %p93 = scmp.ne.s32.totalorder %s76, %s92
      %p94 = scmp.eq.s32.totalorder %s26, 0
      %p95 = por %p93, %p94
      %s96 = ssub.s32 %s20, %s27
      %p97 = scmp.eq.s32.totalorder %s96, 0
      %s99 = sadd.s32 %s98, 1
      %s100 = scalar_select %p97, %s98, %s99
      %p103 = pneg %p97
      %p104 = scmp.eq.s32.totalorder %s20, 1
      %p105 = por %p103, %p104
      %p106 = scmp.ne.s32.totalorder %s98, %s101
      %p107 = scmp.eq.s32.totalorder %s20, 0
      %p108 = por %p106, %p107
      %p109 = scmp.ne.s32.totalorder %s98, %s101
      %p110 = scmp.eq.s32.totalorder %s25, 1
      %p111 = por %p109, %p110
      %p112 = scmp.ne.s32.totalorder %s101, %s102
      %p113 = scmp.eq.s32.totalorder %s25, 0
      %p114 = por %p112, %p113
      %p115 = scmp.ne.s32.totalorder %s101, %s102
      %p116 = scmp.eq.s32.totalorder %s26, 1
      %p117 = por %p115, %p116
      %p119 = scmp.ne.s32.totalorder %s102, %s118
      %p120 = scmp.eq.s32.totalorder %s26, 0
      %p121 = por %p119, %p120
      %s122 = ssub.s32 %s20, %s27
      %p123 = scmp.eq.s32.totalorder %s122, 0
      %s125 = sadd.s32 %s124, 1
      %s126 = scalar_select %p123, %s124, %s125
      %p129 = pneg %p123
      %p130 = scmp.eq.s32.totalorder %s20, 1
      %p131 = por %p129, %p130
      %p132 = scmp.ne.s32.totalorder %s124, %s127
      %p133 = scmp.eq.s32.totalorder %s20, 0
      %p134 = por %p132, %p133
      %p135 = scmp.ne.s32.totalorder %s124, %s127
      %p136 = scmp.eq.s32.totalorder %s25, 1
      %p137 = por %p135, %p136
      %p138 = scmp.ne.s32.totalorder %s127, %s128
      %p139 = scmp.eq.s32.totalorder %s25, 0
      %p140 = por %p138, %p139
      %p141 = scmp.ne.s32.totalorder %s127, %s128
      %p142 = scmp.eq.s32.totalorder %s26, 1
      %p143 = por %p141, %p142
      %p145 = scmp.ne.s32.totalorder %s128, %s144
      %p146 = scmp.eq.s32.totalorder %s26, 0
      %p147 = por %p145, %p146
      %s148 = ssub.s32 %s20, %s27
      %p149 = scmp.eq.s32.totalorder %s148, 0
      %s151 = sadd.s32 %s150, 1
      %s152 = scalar_select %p149, %s150, %s151
      %p155 = pneg %p149
      %p156 = scmp.eq.s32.totalorder %s20, 1
      %p157 = por %p155, %p156
      %p158 = scmp.ne.s32.totalorder %s150, %s153
      %p159 = scmp.eq.s32.totalorder %s20, 0
      %p160 = por %p158, %p159
      %p161 = scmp.ne.s32.totalorder %s150, %s153
      %p162 = scmp.eq.s32.totalorder %s25, 1
      %p163 = por %p161, %p162
      %p164 = scmp.ne.s32.totalorder %s153, %s154
      %p165 = scmp.eq.s32.totalorder %s25, 0
      %p166 = por %p164, %p165
      %p167 = scmp.ne.s32.totalorder %s153, %s154
      %p168 = scmp.eq.s32.totalorder %s26, 1
      %p169 = por %p167, %p168
      %p171 = scmp.ne.s32.totalorder %s154, %s170
      %p172 = scmp.eq.s32.totalorder %s26, 0
      %p173 = por %p171, %p172
      %s174 = ssub.s32 %s20, %s27
      %p175 = scmp.eq.s32.totalorder %s174, 0
      %s177 = sadd.s32 %s176, 1
      %s178 = scalar_select %p175, %s176, %s177
      %p181 = pneg %p175
      %p182 = scmp.eq.s32.totalorder %s20, 1
      %p183 = por %p181, %p182
      %p184 = scmp.ne.s32.totalorder %s176, %s179
      %p185 = scmp.eq.s32.totalorder %s20, 0
      %p186 = por %p184, %p185
      %p187 = scmp.ne.s32.totalorder %s176, %s179
      %p188 = scmp.eq.s32.totalorder %s25, 1
      %p189 = por %p187, %p188
      %p190 = scmp.ne.s32.totalorder %s179, %s180
      %p191 = scmp.eq.s32.totalorder %s25, 0
      %p192 = por %p190, %p191
      %p193 = scmp.ne.s32.totalorder %s179, %s180
      %p194 = scmp.eq.s32.totalorder %s26, 1
      %p195 = por %p193, %p194
      %p197 = scmp.ne.s32.totalorder %s180, %s196
      %p198 = scmp.eq.s32.totalorder %s26, 0
      %p199 = por %p197, %p198
      %s201 = sadd.s32 %s200, 1
      %p204 = scmp.eq.s32.totalorder %s20, 1
      %p205 = scmp.ne.s32.totalorder %s200, %s202
      %p206 = scmp.eq.s32.totalorder %s20, 0
      %p207 = por %p205, %p206
      %p208 = scmp.ne.s32.totalorder %s200, %s202
      %p209 = scmp.eq.s32.totalorder %s25, 1
      %p210 = por %p208, %p209
      %p211 = scmp.ne.s32.totalorder %s202, %s203
      %p212 = scmp.eq.s32.totalorder %s25, 0
      %p213 = por %p211, %p212
      %p214 = scmp.ne.s32.totalorder %s202, %s203
      %p215 = scmp.eq.s32.totalorder %s26, 1
      %p216 = por %p214, %p215
      %p218 = scmp.ne.s32.totalorder %s203, %s217
      %p219 = scmp.eq.s32.totalorder %s26, 0
      %p220 = por %p218, %p219
      %s222 = sadd.s32 %s221, 1
      %p225 = scmp.eq.s32.totalorder %s20, 1
      %p226 = scmp.ne.s32.totalorder %s221, %s223
      %p227 = scmp.eq.s32.totalorder %s20, 0
      %p228 = por %p226, %p227
      %p229 = scmp.ne.s32.totalorder %s221, %s223
      %p230 = scmp.eq.s32.totalorder %s25, 1
      %p231 = por %p229, %p230
      %p232 = scmp.ne.s32.totalorder %s223, %s224
      %p233 = scmp.eq.s32.totalorder %s25, 0
      %p234 = por %p232, %p233
      %p235 = scmp.ne.s32.totalorder %s223, %s224
      %p236 = scmp.eq.s32.totalorder %s26, 1
      %p237 = por %p235, %p236
      %p239 = scmp.ne.s32.totalorder %s224, %s238
      %p240 = scmp.eq.s32.totalorder %s26, 0
      %p241 = por %p239, %p240
      %s243 = sadd.s32 %s242, 1
      %p246 = scmp.eq.s32.totalorder %s20, 1
      %p247 = scmp.ne.s32.totalorder %s242, %s244
      %p248 = scmp.eq.s32.totalorder %s20, 0
      %p249 = por %p247, %p248
      %p250 = scmp.ne.s32.totalorder %s242, %s244
      %p251 = scmp.eq.s32.totalorder %s25, 1
      %p252 = por %p250, %p251
      %p253 = scmp.ne.s32.totalorder %s244, %s245
      %p254 = scmp.eq.s32.totalorder %s25, 0
      %p255 = por %p253, %p254
      %p256 = scmp.ne.s32.totalorder %s244, %s245
      %p257 = scmp.eq.s32.totalorder %s26, 1
      %p258 = por %p256, %p257
      %p260 = scmp.ne.s32.totalorder %s245, %s259
      %p261 = scmp.eq.s32.totalorder %s26, 0
      %p262 = por %p260, %p261
      %s264 = sadd.s32 %s263, 1
      %p267 = scmp.eq.s32.totalorder %s20, 1
      %p268 = scmp.ne.s32.totalorder %s263, %s265
      %p269 = scmp.eq.s32.totalorder %s20, 0
      %p270 = por %p268, %p269
      %p271 = scmp.ne.s32.totalorder %s263, %s265
      %p272 = scmp.eq.s32.totalorder %s25, 1
      %p273 = por %p271, %p272
      %p274 = scmp.ne.s32.totalorder %s265, %s266
      %p275 = scmp.eq.s32.totalorder %s25, 0
      %p276 = por %p274, %p275
      %p277 = scmp.ne.s32.totalorder %s265, %s266
      %p278 = scmp.eq.s32.totalorder %s26, 1
      %p279 = por %p277, %p278
      %p281 = scmp.ne.s32.totalorder %s266, %s280
      %p282 = scmp.eq.s32.totalorder %s26, 0
      %p283 = por %p281, %p282
      %s285 = sadd.s32 %s284, 1
      %p288 = scmp.eq.s32.totalorder %s20, 1
      %p289 = scmp.ne.s32.totalorder %s284, %s286
      %p290 = scmp.eq.s32.totalorder %s20, 0
      %p291 = por %p289, %p290
      %p292 = scmp.ne.s32.totalorder %s284, %s286
      %p293 = scmp.eq.s32.totalorder %s25, 1
      %p294 = por %p292, %p293
      %p295 = scmp.ne.s32.totalorder %s286, %s287
      %p296 = scmp.eq.s32.totalorder %s25, 0
      %p297 = por %p295, %p296
      %p298 = scmp.ne.s32.totalorder %s286, %s287
      %p299 = scmp.eq.s32.totalorder %s26, 1
      %p300 = por %p298, %p299
      %p302 = scmp.ne.s32.totalorder %s287, %s301
      %p303 = scmp.eq.s32.totalorder %s26, 0
      %p304 = por %p302, %p303
      %s306 = sadd.s32 %s305, 1
      %p309 = scmp.eq.s32.totalorder %s20, 1
      %p310 = scmp.ne.s32.totalorder %s305, %s307
      %p311 = scmp.eq.s32.totalorder %s20, 0
      %p312 = por %p310, %p311
      %p313 = scmp.ne.s32.totalorder %s305, %s307
      %p314 = scmp.eq.s32.totalorder %s25, 1
      %p315 = por %p313, %p314
      %p316 = scmp.ne.s32.totalorder %s307, %s308
      %p317 = scmp.eq.s32.totalorder %s25, 0
      %p318 = por %p316, %p317
      %p319 = scmp.ne.s32.totalorder %s307, %s308
      %p320 = scmp.eq.s32.totalorder %s26, 1
      %p321 = por %p319, %p320
      %p323 = scmp.ne.s32.totalorder %s308, %s322
      %p324 = scmp.eq.s32.totalorder %s26, 0
      %p325 = por %p323, %p324
      %p326 = scmp.le.s32.totalorder 1, %s20
      %p327 = scmp.lt.s32.totalorder %s20, 3
      %p328 = pnand %p326, %p327
      %p329 = pneg %p328
      // Predicated region
      $region9: #{distilbert_class_forward.1} parent=5 // pred_check
        _
      $region10: #{distilbert_class_forward.1} parent=5 // pred_check_branch
        %331 = sbr.rel (%p328) target = $region12
      $region11: #{distilbert_class_forward.1} parent=5 // pred_region
        %s332 = ssub.s32 %s20, 1
        // Predicated region
        $region13: #{distilbert_class_forward.1} parent=11 // pred_check
          %p333 = pneg %p41
        $region14: #{distilbert_class_forward.1} parent=11 // pred_check_branch
          %335 = sbr.rel (%p333) target = $region16
        $region15: #{distilbert_class_forward.1} parent=11 // pred_region
          _
        $region16: #{distilbert_class_forward.1} parent=11 // pred_fallthru
          _
        // Predicated region
        $region17: #{distilbert_class_forward.1} parent=11 // pred_check
          %p336 = pneg %p62
        $region18: #{distilbert_class_forward.1} parent=11 // pred_check_branch
          %338 = sbr.rel (%p336) target = $region20
        $region19: #{distilbert_class_forward.1} parent=11 // pred_region
          _
        $region20: #{distilbert_class_forward.1} parent=11 // pred_fallthru
          _
        // Predicated region
        $region21: #{distilbert_class_forward.1} parent=11 // pred_check
          %p339 = pneg %p213
        $region22: #{distilbert_class_forward.1} parent=11 // pred_check_branch
          %341 = sbr.rel (%p339) target = $region24
        $region23: #{distilbert_class_forward.1} parent=11 // pred_region
          _
        $region24: #{distilbert_class_forward.1} parent=11 // pred_fallthru
          _
        // Predicated region
        $region25: #{distilbert_class_forward.1} parent=11 // pred_check
          %p342 = pneg %p234
        $region26: #{distilbert_class_forward.1} parent=11 // pred_check_branch
          %344 = sbr.rel (%p342) target = $region28
        $region27: #{distilbert_class_forward.1} parent=11 // pred_region
          _
        $region28: #{distilbert_class_forward.1} parent=11 // pred_fallthru
          _
        // Predicated region
        $region29: #{distilbert_class_forward.1} parent=11 // pred_check
          %p345 = pneg %p255
        $region30: #{distilbert_class_forward.1} parent=11 // pred_check_branch
          %347 = sbr.rel (%p345) target = $region32
        $region31: #{distilbert_class_forward.1} parent=11 // pred_region
          _
        $region32: #{distilbert_class_forward.1} parent=11 // pred_fallthru
          _
        // Predicated region
        $region33: #{distilbert_class_forward.1} parent=11 // pred_check
          %p348 = pneg %p276
        $region34: #{distilbert_class_forward.1} parent=11 // pred_check_branch
          %350 = sbr.rel (%p348) target = $region36
        $region35: #{distilbert_class_forward.1} parent=11 // pred_region
          _
        $region36: #{distilbert_class_forward.1} parent=11 // pred_fallthru
          _
      $region12: #{distilbert_class_forward.1} parent=5 // pred_fallthru
        _
      %p351 = scmp.lt.s32.totalorder %s20, 2
      // Predicated region
      $region37: #{distilbert_class_forward.1} parent=5 // pred_check
        %p352 = pneg %p351
      $region38: #{distilbert_class_forward.1} parent=5 // pred_check_branch
        %354 = sbr.rel (%p352) target = $region40
      $region39: #{distilbert_class_forward.1} parent=5 // pred_region
        // Predicated region
        $region41: #{distilbert_class_forward.1} parent=39 // pred_check
          %p355 = pneg %p82
        $region42: #{distilbert_class_forward.1} parent=39 // pred_check_branch
          %357 = sbr.rel (%p355) target = $region44
        $region43: #{distilbert_class_forward.1} parent=39 // pred_region
          %p358 = scmp.lt.s32.totalorder %s20, 1
          %s359 = scalar_select %p358, %s20, 1
          %s360 = smul.addr %s359, 48
          %s361 = smul.addr %s360, 4
          %s362 = scalar_lea.vmem %s2, %s361
        $region44: #{distilbert_class_forward.1} parent=39 // pred_fallthru
          _
        // Predicated region
        $region45: #{distilbert_class_forward.1} parent=39 // pred_check
          %p363 = pneg %p108
        $region46: #{distilbert_class_forward.1} parent=39 // pred_check_branch
          %365 = sbr.rel (%p363) target = $region48
        $region47: #{distilbert_class_forward.1} parent=39 // pred_region
          %p366 = scmp.lt.s32.totalorder %s20, 1
          %s367 = scalar_select %p366, %s20, 1
          %s368 = smul.addr %s367, 8
          %s369 = smul.addr %s368, 4
          %s370 = scalar_lea.vmem %s3, %s369
        $region48: #{distilbert_class_forward.1} parent=39 // pred_fallthru
          _
        // Predicated region
        $region49: #{distilbert_class_forward.1} parent=39 // pred_check
          %p371 = pneg %p134
        $region50: #{distilbert_class_forward.1} parent=39 // pred_check_branch
          %373 = sbr.rel (%p371) target = $region52
        $region51: #{distilbert_class_forward.1} parent=39 // pred_region
          %p374 = scmp.lt.s32.totalorder %s20, 1
          %s375 = scalar_select %p374, %s20, 1
          %s376 = smul.addr %s375, 8
          %s377 = smul.addr %s376, 4
          %s378 = scalar_lea.vmem %s4, %s377
        $region52: #{distilbert_class_forward.1} parent=39 // pred_fallthru
          _
        // Predicated region
        $region53: #{distilbert_class_forward.1} parent=39 // pred_check
          %p379 = pneg %p160
        $region54: #{distilbert_class_forward.1} parent=39 // pred_check_branch
          %381 = sbr.rel (%p379) target = $region56
        $region55: #{distilbert_class_forward.1} parent=39 // pred_region
          %p382 = scmp.lt.s32.totalorder %s20, 1
          %s383 = scalar_select %p382, %s20, 1
          %s384 = smul.addr %s383, 16
          %s385 = smul.addr %s384, 4
          %s386 = scalar_lea.vmem %s5, %s385
        $region56: #{distilbert_class_forward.1} parent=39 // pred_fallthru
          _
        // Predicated region
        $region57: #{distilbert_class_forward.1} parent=39 // pred_check
          %p387 = pneg %p186
        $region58: #{distilbert_class_forward.1} parent=39 // pred_check_branch
          %389 = sbr.rel (%p387) target = $region60
        $region59: #{distilbert_class_forward.1} parent=39 // pred_region
          %p390 = scmp.lt.s32.totalorder %s20, 1
          %s391 = scalar_select %p390, %s20, 1
          %s392 = smul.addr %s391, 8
          %s393 = scalar_lea.vmem %s6, %s392
        $region60: #{distilbert_class_forward.1} parent=39 // pred_fallthru
          _
      $region40: #{distilbert_class_forward.1} parent=5 // pred_fallthru
        _
      %p394 = scmp.le.s32.totalorder 1, %s20
      %p395 = scmp.lt.s32.totalorder %s20, 3
      %p396 = pnand %p394, %p395
      %p397 = pneg %p396
      // Predicated region
      $region61: #{distilbert_class_forward.1} parent=5 // pred_check
        _
      $region62: #{distilbert_class_forward.1} parent=5 // pred_check_branch
        %399 = sbr.rel (%p396) target = $region64
      $region63: #{distilbert_class_forward.1} parent=5 // pred_region
        %s400 = ssub.s32 %s20, 1
        %p401 = pneg %p41
        %p402 = pneg %p38
        %p403 = pneg %p62
        %p404 = pneg %p59
        %p405 = scmp.lt.s32.totalorder %s25, 1
        %s406 = scalar_select %p405, %s25, 1
        %s407 = smul.addr %s406, 48
        %s408 = smul.addr %s407, 4
        %s409 = scalar_lea.vmem %s2, %s408
        %p410 = pneg %p88
        %p411 = pneg %p85
        %p412 = scmp.lt.s32.totalorder %s25, 1
        %s413 = scalar_select %p412, %s25, 1
        %s414 = smul.addr %s413, 8
        %s415 = smul.addr %s414, 4
        %s416 = scalar_lea.vmem %s3, %s415
        %p417 = pneg %p114
        %p418 = pneg %p111
        %p419 = scmp.lt.s32.totalorder %s25, 1
        %s420 = scalar_select %p419, %s25, 1
        %s421 = smul.addr %s420, 8
        %s422 = smul.addr %s421, 4
        %s423 = scalar_lea.vmem %s4, %s422
        %p424 = pneg %p140
        %p425 = pneg %p137
        %p426 = scmp.lt.s32.totalorder %s25, 1
        %s427 = scalar_select %p426, %s25, 1
        %s428 = smul.addr %s427, 16
        %s429 = smul.addr %s428, 4
        %s430 = scalar_lea.vmem %s5, %s429
        %p431 = pneg %p166
        %p432 = pneg %p163
        %p433 = scmp.lt.s32.totalorder %s25, 1
        %s434 = scalar_select %p433, %s25, 1
        %s435 = smul.addr %s434, 8
        %s436 = scalar_lea.vmem %s6, %s435
        %p437 = pneg %p192
        %p438 = pneg %p189
        %p439 = pneg %p213
        %p440 = pneg %p210
        %p441 = pneg %p234
        %p442 = pneg %p231
        %p443 = pneg %p255
        %p444 = pneg %p252
        %p445 = pneg %p276
        %p446 = pneg %p273
        %p447 = pneg %p297
        %p448 = pneg %p294
        %p449 = pneg %p318
        %p450 = pneg %p315
        %p451 = scmp.lt.s32.totalorder %s25, 1
        %s452 = scalar_select %p451, %s25, 1
        %s453 = smul.addr %s452, 48
        %s454 = smul.addr %s453, 4
        %s455 = scalar_lea.vmem %s2, %s454
        %p456 = scmp.lt.s32.totalorder %s25, 1
        %s457 = scalar_select %p456, %s25, 1
        %s458 = smul.addr %s457, 8
        %s459 = smul.addr %s458, 4
        %s460 = scalar_lea.vmem %s3, %s459
        %p461 = scmp.lt.s32.totalorder %s25, 1
        %s462 = scalar_select %p461, %s25, 1
        %s463 = smul.addr %s462, 8
        %s464 = smul.addr %s463, 4
        %s465 = scalar_lea.vmem %s4, %s464
        %p466 = scmp.lt.s32.totalorder %s25, 1
        %s467 = scalar_select %p466, %s25, 1
        %s468 = smul.addr %s467, 16
        %s469 = smul.addr %s468, 4
        %s470 = scalar_lea.vmem %s5, %s469
        %p471 = scmp.lt.s32.totalorder %s25, 1
        %s472 = scalar_select %p471, %s25, 1
        %s473 = smul.addr %s472, 8
        %s474 = scalar_lea.vmem %s6, %s473
        %p476 = scmp.eq.s32.totalorder %s25, 0
        // Predicated region
        $region65: #{distilbert_class_forward.1} parent=63 // pred_check
          %p477 = pneg %p476
        $region66: #{distilbert_class_forward.1} parent=63 // pred_check_branch
          %479 = sbr.rel (%p477) target = $region68
        $region67: #{distilbert_class_forward.1} parent=63 // pred_region
          %v480 = vld [vmem:[%s0] sm:$0xff]
          %v481 = vld [vmem:[%s0 + $0x8] sm:$0xff]
          %vm482 = vcmask 523264
          %483 = vst.msk [vmem:[%s11] sm:$0xff] %vm482, %v480
          %484 = vst.msk [vmem:[%s11 + $0x8] sm:$0xff] %vm482, %v481
        $region68: #{distilbert_class_forward.1} parent=63 // pred_fallthru
          _
        %v485 = vld [vmem:[%s11] sm:$0xff]
        %v486 = vld [vmem:[%s11 + $0x8] sm:$0xff]
        %v487 = vpack.c.bf16 %v486, %v485
        %v488 = vld [vmem:[%s474] sm:$0xff]
        %v489 = vld [vmem:[%s455] sm:$0xf]
        %v490 = vld [vmem:[%s455 + $0x4] sm:$0xf]
        %v491 = vld [vmem:[%s455 + $0x8] sm:$0xf]
        %v492 = vld [vmem:[%s455 + $0xc] sm:$0xf]
        %v493 = vld [vmem:[%s455 + $0x10] sm:$0xf]
        %v494 = vld [vmem:[%s455 + $0x14] sm:$0xf]
        %v495 = vld [vmem:[%s455 + $0x18] sm:$0xf]
        %v496 = vld [vmem:[%s455 + $0x1c] sm:$0xf]
        %v497 = vld [vmem:[%s455 + $0x20] sm:$0xf]
        %v498 = vld [vmem:[%s455 + $0x24] sm:$0xf]
        %v499 = vld [vmem:[%s455 + $0x28] sm:$0xf]
        %v500 = vld [vmem:[%s455 + $0x2c] sm:$0xf]
        %v501 = vld [vmem:[%s455 + $0x30] sm:$0xf]
        %v502 = vld [vmem:[%s455 + $0x34] sm:$0xf]
        %v503 = vld [vmem:[%s455 + $0x38] sm:$0xf]
        %v504 = vld [vmem:[%s455 + $0x3c] sm:$0xf]
        %v505 = vld [vmem:[%s455 + $0x40] sm:$0xf]
        %v506 = vld [vmem:[%s455 + $0x44] sm:$0xf]
        %v507 = vld [vmem:[%s455 + $0x48] sm:$0xf]
        %v508 = vld [vmem:[%s455 + $0x4c] sm:$0xf]
        %v509 = vld [vmem:[%s455 + $0x50] sm:$0xf]
        %v510 = vld [vmem:[%s455 + $0x54] sm:$0xf]
        %v511 = vld [vmem:[%s455 + $0x58] sm:$0xf]
        %v512 = vld [vmem:[%s455 + $0x5c] sm:$0xf]
        %v513 = vld [vmem:[%s455 + $0x60] sm:$0xf]
        %v514 = vld [vmem:[%s455 + $0x64] sm:$0xf]
        %v515 = vld [vmem:[%s455 + $0x68] sm:$0xf]
        %v516 = vld [vmem:[%s455 + $0x6c] sm:$0xf]
        %v517 = vld [vmem:[%s455 + $0x70] sm:$0xf]
        %v518 = vld [vmem:[%s455 + $0x74] sm:$0xf]
        %v519 = vld [vmem:[%s455 + $0x78] sm:$0xf]
        %v520 = vld [vmem:[%s455 + $0x7c] sm:$0xf]
        %v521 = vld [vmem:[%s455 + $0x80] sm:$0xf]
        %v522 = vld [vmem:[%s455 + $0x84] sm:$0xf]
        %v523 = vld [vmem:[%s455 + $0x88] sm:$0xf]
        %v524 = vld [vmem:[%s455 + $0x8c] sm:$0xf]
        %v525 = vld [vmem:[%s455 + $0x90] sm:$0xf]
        %v526 = vld [vmem:[%s455 + $0x94] sm:$0xf]
        %v527 = vld [vmem:[%s455 + $0x98] sm:$0xf]
        %v528 = vld [vmem:[%s455 + $0x9c] sm:$0xf]
        %v529 = vld [vmem:[%s455 + $0xa0] sm:$0xf]
        %v530 = vld [vmem:[%s455 + $0xa4] sm:$0xf]
        %v531 = vld [vmem:[%s455 + $0xa8] sm:$0xf]
        %v532 = vld [vmem:[%s455 + $0xac] sm:$0xf]
        %v533 = vld [vmem:[%s455 + $0xb0] sm:$0xf]
        %v534 = vld [vmem:[%s455 + $0xb4] sm:$0xf]
        %v535 = vld [vmem:[%s455 + $0xb8] sm:$0xf]
        %v536 = vld [vmem:[%s455 + $0xbc] sm:$0xf]
        %v537 = vlaneseq
        %v538 = vshrl.u32 %v537, 7
        %v539 = vsub.s32 0, %v538
        %v540 = vrot.slane %v488, %v539
        %v549 = vunpack.c.l.b16 %v489
        %v550 = vunpack.c.l.b16 %v490
        %v551 = vunpack.c.l.b16 %v491
        %v552 = vunpack.c.l.b16 %v492
        %v553 = vunpack.c.l.b16 %v493
        %v554 = vunpack.c.l.b16 %v494
        %v555 = vunpack.c.l.b16 %v495
        %v556 = vunpack.c.l.b16 %v496
        %v557 = vpack.c.b16 %v550, %v549
        %v558 = vpack.c.b16 %v552, %v551
        %v559 = vpack.c.b16 %v554, %v553
        %v560 = vpack.c.b16 %v556, %v555
        %vm565 = vcmask 523264
        %v567 = vsel %vm565, %v487, 0
        %569 = vmatprep.subr.bf16.mxu0 0
        %570 = vmatpush1.bf16.msra.mxu0 %v557
        %571 = vmatprep.subr.bf16.mxu0 0
        %572 = vmatpush1.bf16.msra.mxu0 %v558
        %573 = vmatprep.subr.bf16.mxu0 0
        %574 = vmatpush1.bf16.msra.mxu0 %v559
        %575 = vmatprep.subr.bf16.mxu0 0
        %576 = vmatpush1.bf16.msra.mxu0 %v560
        %577 = vmatprep.subr.bf16.mxu0 0
        %578 = vmatpush1.bf16.msra.mxu0 0
        %579 = vmatprep.subr.bf16.mxu0 0
        %580 = vmatpush1.bf16.msra.mxu0 0
        %581 = vmatprep.subr.bf16.mxu0 0
        %582 = vmatpush1.bf16.msra.mxu0 0
        %583 = vmatprep.subr.bf16.mxu0 0
        %584 = vmatpush1.bf16.msra.mxu0 0
        %585 = vmatprep.subr.bf16.mxu0 0
        %586 = vmatpush1.bf16.msra.mxu0 0
        %587 = vmatprep.subr.bf16.mxu0 0
        %588 = vmatpush1.bf16.msra.mxu0 0
        %589 = vmatprep.subr.bf16.mxu0 0
        %590 = vmatpush1.bf16.msra.mxu0 0
        %591 = vmatprep.subr.bf16.mxu0 0
        %592 = vmatpush1.bf16.msra.mxu0 0
        %593 = vmatprep.subr.bf16.mxu0 0
        %594 = vmatpush1.bf16.msra.mxu0 0
        %595 = vmatprep.subr.bf16.mxu0 0
        %596 = vmatpush1.bf16.msra.mxu0 0
        %597 = vmatprep.subr.bf16.mxu0 0
        %598 = vmatpush1.bf16.msra.mxu0 0
        %599 = vmatprep.subr.bf16.mxu0 0
        %600 = vmatpush1.bf16.msra.mxu0 0
        %601 = vmatprep.mubr.bf16.mxu0 0
        %602 = vmatmul.mubr.bf16.gmra.mrb[0].mxu0 %v567
        %v603 = vpop.f32.mrb[0].mxu0
        %v604 = vadd.f32 %v540, %v603
        %v605 = vpop.f32.mrb[0].mxu0
        %v606 = vpop.f32.mrb[0].mxu0
        %v607 = vadd.f32 %v540, %v606
        %v608 = vpop.f32.mrb[0].mxu0
        %609 = vdwg.mxu0
        %v618 = vunpack.c.l.b16 %v505
        %v619 = vunpack.c.l.b16 %v506
        %v620 = vunpack.c.l.b16 %v507
        %v621 = vunpack.c.l.b16 %v508
        %v622 = vunpack.c.l.b16 %v509
        %v623 = vunpack.c.l.b16 %v510
        %v624 = vunpack.c.l.b16 %v511
        %v625 = vunpack.c.l.b16 %v512
        %v626 = vpack.c.b16 %v619, %v618
        %v627 = vpack.c.b16 %v621, %v620
        %v628 = vpack.c.b16 %v623, %v622
        %v629 = vpack.c.b16 %v625, %v624
        %635 = vrot.lane.b32.xlu0 %v540, 64
        %v636 = vpop.permute.xlu0 %635
        %638 = vmatprep.subr.bf16.mxu0 0
        %639 = vmatpush1.bf16.msra.mxu0 %v626
        %640 = vmatprep.subr.bf16.mxu0 0
        %641 = vmatpush1.bf16.msra.mxu0 %v627
        %642 = vmatprep.subr.bf16.mxu0 0
        %643 = vmatpush1.bf16.msra.mxu0 %v628
        %644 = vmatprep.subr.bf16.mxu0 0
        %645 = vmatpush1.bf16.msra.mxu0 %v629
        %646 = vmatprep.subr.bf16.mxu0 0
        %647 = vmatpush1.bf16.msra.mxu0 0
        %648 = vmatprep.subr.bf16.mxu0 0
        %649 = vmatpush1.bf16.msra.mxu0 0
        %650 = vmatprep.subr.bf16.mxu0 0
        %651 = vmatpush1.bf16.msra.mxu0 0
        %652 = vmatprep.subr.bf16.mxu0 0
        %653 = vmatpush1.bf16.msra.mxu0 0
        %654 = vmatprep.subr.bf16.mxu0 0
        %655 = vmatpush1.bf16.msra.mxu0 0
        %656 = vmatprep.subr.bf16.mxu0 0
        %657 = vmatpush1.bf16.msra.mxu0 0
        %658 = vmatprep.subr.bf16.mxu0 0
        %659 = vmatpush1.bf16.msra.mxu0 0
        %660 = vmatprep.subr.bf16.mxu0 0
        %661 = vmatpush1.bf16.msra.mxu0 0
        %662 = vmatprep.subr.bf16.mxu0 0
        %663 = vmatpush1.bf16.msra.mxu0 0
        %664 = vmatprep.subr.bf16.mxu0 0
        %665 = vmatpush1.bf16.msra.mxu0 0
        %666 = vmatprep.subr.bf16.mxu0 0
        %667 = vmatpush1.bf16.msra.mxu0 0
        %668 = vmatprep.subr.bf16.mxu0 0
        %669 = vmatpush1.bf16.msra.mxu0 0
        %670 = vmatprep.mubr.bf16.mxu0 0
        %671 = vmatmul.mubr.bf16.gmra.mrb[0].mxu0 %v567
        %v672 = vpop.f32.mrb[0].mxu0
        %v673 = vadd.f32 %v636, %v672
        %v674 = vpop.f32.mrb[0].mxu0
        %v675 = vpop.f32.mrb[0].mxu0
        %v676 = vadd.f32 %v636, %v675
        %v677 = vpop.f32.mrb[0].mxu0
        %678 = vdwg.mxu0
        %v679 = vlaneseq
        %v680 = vshrl.u32 %v679, 7
        %v681 = vsub.s32 1, %v680
        %v682 = vrot.slane %v488, %v681
        %v691 = vunpack.c.l.b16 %v521
        %v692 = vunpack.c.l.b16 %v522
        %v693 = vunpack.c.l.b16 %v523
        %v694 = vunpack.c.l.b16 %v524
        %v695 = vunpack.c.l.b16 %v525
        %v696 = vunpack.c.l.b16 %v526
        %v697 = vunpack.c.l.b16 %v527
        %v698 = vunpack.c.l.b16 %v528
        %v699 = vpack.c.b16 %v692, %v691
        %v700 = vpack.c.b16 %v694, %v693
        %v701 = vpack.c.b16 %v696, %v695
        %v702 = vpack.c.b16 %v698, %v697
        %707 = vmatprep.subr.bf16.mxu0 0
        %708 = vmatpush1.bf16.msra.mxu0 %v699
        %709 = vmatprep.subr.bf16.mxu0 0
        %710 = vmatpush1.bf16.msra.mxu0 %v700
        %711 = vmatprep.subr.bf16.mxu0 0
        %712 = vmatpush1.bf16.msra.mxu0 %v701
        %713 = vmatprep.subr.bf16.mxu0 0
        %714 = vmatpush1.bf16.msra.mxu0 %v702
        %715 = vmatprep.subr.bf16.mxu0 0
        %716 = vmatpush1.bf16.msra.mxu0 0
        %717 = vmatprep.subr.bf16.mxu0 0
        %718 = vmatpush1.bf16.msra.mxu0 0
        %719 = vmatprep.subr.bf16.mxu0 0
        %720 = vmatpush1.bf16.msra.mxu0 0
        %721 = vmatprep.subr.bf16.mxu0 0
        %722 = vmatpush1.bf16.msra.mxu0 0
        %723 = vmatprep.subr.bf16.mxu0 0
        %724 = vmatpush1.bf16.msra.mxu0 0
        %725 = vmatprep.subr.bf16.mxu0 0
        %726 = vmatpush1.bf16.msra.mxu0 0
        %727 = vmatprep.subr.bf16.mxu0 0
        %728 = vmatpush1.bf16.msra.mxu0 0
        %729 = vmatprep.subr.bf16.mxu0 0
        %730 = vmatpush1.bf16.msra.mxu0 0
        %731 = vmatprep.subr.bf16.mxu0 0
        %732 = vmatpush1.bf16.msra.mxu0 0
        %733 = vmatprep.subr.bf16.mxu0 0
        %734 = vmatpush1.bf16.msra.mxu0 0
        %735 = vmatprep.subr.bf16.mxu0 0
        %736 = vmatpush1.bf16.msra.mxu0 0
        %737 = vmatprep.subr.bf16.mxu0 0
        %738 = vmatpush1.bf16.msra.mxu0 0
        %739 = vmatprep.mubr.bf16.mxu0 0
        %740 = vmatmul.mubr.bf16.gmra.mrb[0].mxu0 %v567
        %v741 = vpop.f32.mrb[0].mxu0
        %v742 = vadd.f32 %v682, %v741
        %v743 = vpop.f32.mrb[0].mxu0
        %v744 = vpop.f32.mrb[0].mxu0
        %v745 = vadd.f32 %v682, %v744
        %v746 = vpop.f32.mrb[0].mxu0
        %747 = vdwg.mxu0
        %v756 = vunpack.c.l.b16 %v497
        %v757 = vunpack.c.l.b16 %v498
        %v758 = vunpack.c.l.b16 %v499
        %v759 = vunpack.c.l.b16 %v500
        %v760 = vunpack.c.l.b16 %v501
        %v761 = vunpack.c.l.b16 %v502
        %v762 = vunpack.c.l.b16 %v503
        %v763 = vunpack.c.l.b16 %v504
        %v764 = vpack.c.b16 %v757, %v756
        %v765 = vpack.c.b16 %v759, %v758
        %v766 = vpack.c.b16 %v761, %v760
        %v767 = vpack.c.b16 %v763, %v762
        %772 = vrot.lane.b32.xlu0 %v540, 96
        %v773 = vpop.permute.xlu0 %772
        %775 = vmatprep.subr.bf16.mxu0 0
        %776 = vmatpush1.bf16.msra.mxu0 %v764
        %777 = vmatprep.subr.bf16.mxu0 0
        %778 = vmatpush1.bf16.msra.mxu0 %v765
        %779 = vmatprep.subr.bf16.mxu0 0
        %780 = vmatpush1.bf16.msra.mxu0 %v766
        %781 = vmatprep.subr.bf16.mxu0 0
        %782 = vmatpush1.bf16.msra.mxu0 %v767
        %783 = vmatprep.subr.bf16.mxu0 0
        %784 = vmatpush1.bf16.msra.mxu0 0
        %785 = vmatprep.subr.bf16.mxu0 0
        %786 = vmatpush1.bf16.msra.mxu0 0
        %787 = vmatprep.subr.bf16.mxu0 0
        %788 = vmatpush1.bf16.msra.mxu0 0
        %789 = vmatprep.subr.bf16.mxu0 0
        %790 = vmatpush1.bf16.msra.mxu0 0
        %791 = vmatprep.subr.bf16.mxu0 0
        %792 = vmatpush1.bf16.msra.mxu0 0
        %793 = vmatprep.subr.bf16.mxu0 0
        %794 = vmatpush1.bf16.msra.mxu0 0
        %795 = vmatprep.subr.bf16.mxu0 0
        %796 = vmatpush1.bf16.msra.mxu0 0
        %797 = vmatprep.subr.bf16.mxu0 0
        %798 = vmatpush1.bf16.msra.mxu0 0
        %799 = vmatprep.subr.bf16.mxu0 0
        %800 = vmatpush1.bf16.msra.mxu0 0
        %801 = vmatprep.subr.bf16.mxu0 0
        %802 = vmatpush1.bf16.msra.mxu0 0
        %803 = vmatprep.subr.bf16.mxu0 0
        %804 = vmatpush1.bf16.msra.mxu0 0
        %805 = vmatprep.subr.bf16.mxu0 0
        %806 = vmatpush1.bf16.msra.mxu0 0
        %807 = vmatprep.mubr.bf16.mxu0 0
        %808 = vmatmul.mubr.bf16.gmra.mrb[0].mxu0 %v567
        %v809 = vpop.f32.mrb[0].mxu0
        %v810 = vadd.f32 %v773, %v809
        %v811 = vpop.f32.mrb[0].mxu0
        %v812 = vpop.f32.mrb[0].mxu0
        %v813 = vadd.f32 %v773, %v812
        %v814 = vpop.f32.mrb[0].mxu0
        %815 = vdwg.mxu0
        %v824 = vunpack.c.l.b16 %v513
        %v825 = vunpack.c.l.b16 %v514
        %v826 = vunpack.c.l.b16 %v515
        %v827 = vunpack.c.l.b16 %v516
        %v828 = vunpack.c.l.b16 %v517
        %v829 = vunpack.c.l.b16 %v518
        %v830 = vunpack.c.l.b16 %v519
        %v831 = vunpack.c.l.b16 %v520
        %v832 = vpack.c.b16 %v825, %v824
        %v833 = vpack.c.b16 %v827, %v826
        %v834 = vpack.c.b16 %v829, %v828
        %v835 = vpack.c.b16 %v831, %v830
        %840 = vrot.lane.b32.xlu0 %v540, 32
        %v841 = vpop.permute.xlu0 %840
        %843 = vmatprep.subr.bf16.mxu0 0
        %844 = vmatpush1.bf16.msra.mxu0 %v832
        %845 = vmatprep.subr.bf16.mxu0 0
        %846 = vmatpush1.bf16.msra.mxu0 %v833
        %847 = vmatprep.subr.bf16.mxu0 0
        %848 = vmatpush1.bf16.msra.mxu0 %v834
        %849 = vmatprep.subr.bf16.mxu0 0
        %850 = vmatpush1.bf16.msra.mxu0 %v835
        %851 = vmatprep.subr.bf16.mxu0 0
        %852 = vmatpush1.bf16.msra.mxu0 0
        %853 = vmatprep.subr.bf16.mxu0 0
        %854 = vmatpush1.bf16.msra.mxu0 0
        %855 = vmatprep.subr.bf16.mxu0 0
        %856 = vmatpush1.bf16.msra.mxu0 0
        %857 = vmatprep.subr.bf16.mxu0 0
        %858 = vmatpush1.bf16.msra.mxu0 0
        %859 = vmatprep.subr.bf16.mxu0 0
        %860 = vmatpush1.bf16.msra.mxu0 0
        %861 = vmatprep.subr.bf16.mxu0 0
        %862 = vmatpush1.bf16.msra.mxu0 0
        %863 = vmatprep.subr.bf16.mxu0 0
        %864 = vmatpush1.bf16.msra.mxu0 0
        %865 = vmatprep.subr.bf16.mxu0 0
        %866 = vmatpush1.bf16.msra.mxu0 0
        %867 = vmatprep.subr.bf16.mxu0 0
        %868 = vmatpush1.bf16.msra.mxu0 0
        %869 = vmatprep.subr.bf16.mxu0 0
        %870 = vmatpush1.bf16.msra.mxu0 0
        %871 = vmatprep.subr.bf16.mxu0 0
        %872 = vmatpush1.bf16.msra.mxu0 0
        %873 = vmatprep.subr.bf16.mxu0 0
        %874 = vmatpush1.bf16.msra.mxu0 0
        %875 = vmatprep.mubr.bf16.mxu0 0
        %876 = vmatmul.mubr.bf16.gmra.mrb[0].mxu0 %v567
        %v877 = vpop.f32.mrb[0].mxu0
        %v878 = vadd.f32 %v841, %v877
        %v879 = vpop.f32.mrb[0].mxu0
        %v880 = vpop.f32.mrb[0].mxu0
        %v881 = vadd.f32 %v841, %v880
        %v882 = vpop.f32.mrb[0].mxu0
        %883 = vdwg.mxu0
        %v892 = vunpack.c.l.b16 %v529
        %v893 = vunpack.c.l.b16 %v530
        %v894 = vunpack.c.l.b16 %v531
        %v895 = vunpack.c.l.b16 %v532
        %v896 = vunpack.c.l.b16 %v533
        %v897 = vunpack.c.l.b16 %v534
        %v898 = vunpack.c.l.b16 %v535
        %v899 = vunpack.c.l.b16 %v536
        %v900 = vpack.c.b16 %v893, %v892
        %v901 = vpack.c.b16 %v895, %v894
        %v902 = vpack.c.b16 %v897, %v896
        %v903 = vpack.c.b16 %v899, %v898
        %909 = vrot.lane.b32.xlu0 %v682, 96
        %v910 = vpop.permute.xlu0 %909
        %912 = vmatprep.subr.bf16.mxu0 0
        %913 = vmatpush1.bf16.msra.mxu0 %v900
        %914 = vmatprep.subr.bf16.mxu0 0
        %915 = vmatpush1.bf16.msra.mxu0 %v901
        %916 = vmatprep.subr.bf16.mxu0 0
        %917 = vmatpush1.bf16.msra.mxu0 %v902
        %918 = vmatprep.subr.bf16.mxu0 0
        %919 = vmatpush1.bf16.msra.mxu0 %v903
        %920 = vmatprep.subr.bf16.mxu0 0
        %921 = vmatpush1.bf16.msra.mxu0 0
        %922 = vmatprep.subr.bf16.mxu0 0
        %923 = vmatpush1.bf16.msra.mxu0 0
        %924 = vmatprep.subr.bf16.mxu0 0
        %925 = vmatpush1.bf16.msra.mxu0 0
        %926 = vmatprep.subr.bf16.mxu0 0
        %927 = vmatpush1.bf16.msra.mxu0 0
        %928 = vmatprep.subr.bf16.mxu0 0
        %929 = vmatpush1.bf16.msra.mxu0 0
        %930 = vmatprep.subr.bf16.mxu0 0
        %931 = vmatpush1.bf16.msra.mxu0 0
        %932 = vmatprep.subr.bf16.mxu0 0
        %933 = vmatpush1.bf16.msra.mxu0 0
        %934 = vmatprep.subr.bf16.mxu0 0
        %935 = vmatpush1.bf16.msra.mxu0 0
        %936 = vmatprep.subr.bf16.mxu0 0
        %937 = vmatpush1.bf16.msra.mxu0 0
        %938 = vmatprep.subr.bf16.mxu0 0
        %939 = vmatpush1.bf16.msra.mxu0 0
        %940 = vmatprep.subr.bf16.mxu0 0
        %941 = vmatpush1.bf16.msra.mxu0 0
        %942 = vmatprep.subr.bf16.mxu0 0
        %943 = vmatpush1.bf16.msra.mxu0 0
        %944 = vmatprep.mubr.bf16.mxu0 0
        %945 = vmatmul.mubr.bf16.gmra.mrb[0].mxu0 %v567
        %v946 = vpop.f32.mrb[0].mxu0
        %v947 = vadd.f32 %v910, %v946
        %v948 = vpop.f32.mrb[0].mxu0
        %v949 = vpop.f32.mrb[0].mxu0
        %v950 = vadd.f32 %v910, %v949
        %v951 = vpop.f32.mrb[0].mxu0
        %952 = vdwg.mxu0
        %v953 = vpack.c.bf16 %v604, %v604
        %v954 = vpack.c.bf16 %v607, %v607
        %v955 = vpack.c.bf16 %v810, %v810
        %v956 = vpack.c.bf16 %v813, %v813
        %v957 = vpack.c.bf16 %v673, %v673
        %v958 = vpack.c.bf16 %v676, %v676
        %v959 = vpack.c.bf16 %v878, %v878
        %v960 = vpack.c.bf16 %v881, %v881
        %v961 = vpack.c.bf16 %v742, %v742
        %v962 = vpack.c.bf16 %v745, %v745
        %v963 = vpack.c.bf16 %v947, %v947
        %v964 = vpack.c.bf16 %v950, %v950
        %vm965 = vcmask 261120
        %v967 = vsel %vm965, %v953, 0
        %v970 = vsel %vm965, %v957, 0
        %972 = vmatprep.subr.bf16.mxu0 0
        %973 = vmatpush1.bf16.xpose.msra.mxu0 %v970
        %974 = vmatprep.subr.bf16.mxu0 0
        %975 = vmatpush1.bf16.xpose.msra.mxu0 0
        %976 = vmatprep.subr.bf16.mxu0 0
        %977 = vmatpush1.bf16.xpose.msra.mxu0 0
        %978 = vmatprep.subr.bf16.mxu0 0
        %979 = vmatpush1.bf16.xpose.msra.mxu0 0
        %980 = vmatprep.subr.bf16.mxu0 0
        %981 = vmatpush1.bf16.xpose.msra.mxu0 0
        %982 = vmatprep.subr.bf16.mxu0 0
        %983 = vmatpush1.bf16.xpose.msra.mxu0 0
        %984 = vmatprep.subr.bf16.mxu0 0
        %985 = vmatpush1.bf16.xpose.msra.mxu0 0
        %986 = vmatprep.subr.bf16.mxu0 0
        %987 = vmatpush1.bf16.xpose.msra.mxu0 0
        %988 = vmatprep.subr.bf16.mxu0 0
        %989 = vmatpush1.bf16.xpose.msra.mxu0 0
        %990 = vmatprep.subr.bf16.mxu0 0
        %991 = vmatpush1.bf16.xpose.msra.mxu0 0
        %992 = vmatprep.subr.bf16.mxu0 0
        %993 = vmatpush1.bf16.xpose.msra.mxu0 0
        %994 = vmatprep.subr.bf16.mxu0 0
        %995 = vmatpush1.bf16.xpose.msra.mxu0 0
        %996 = vmatprep.subr.bf16.mxu0 0
        %997 = vmatpush1.bf16.xpose.msra.mxu0 0
        %998 = vmatprep.subr.bf16.mxu0 0
        %999 = vmatpush1.bf16.xpose.msra.mxu0 0
        %1000 = vmatprep.subr.bf16.mxu0 0
        %1001 = vmatpush1.bf16.xpose.msra.mxu0 0
        %1002 = vmatprep.subr.bf16.mxu0 0
        %1003 = vmatpush1.bf16.xpose.msra.mxu0 0
        %1004 = vmatprep.mubr.bf16.mxu0 0
        %1005 = vmatmul.mubr.bf16.gmra.mrb[0].mxu0 %v967
        %v1006 = vpop.f32.mrb[0].mxu0
        %v1007 = vadd.f32 0.0, %v1006
        %v1008 = vpop.f32.mrb[0].mxu0
        %v1009 = vpop.f32.mrb[0].mxu0
        %v1010 = vpop.f32.mrb[0].mxu0
        %1011 = vdwg.mxu0
        %v1013 = vsel %vm965, %v954, 0
        %v1016 = vsel %vm965, %v958, 0
        %1018 = vmatprep.subr.bf16.mxu0 0
        %1019 = vmatpush1.bf16.xpose.msra.mxu0 %v1016
        %1020 = vmatprep.subr.bf16.mxu0 0
        %1021 = vmatpush1.bf16.xpose.msra.mxu0 0
        %1022 = vmatprep.subr.bf16.mxu0 0
        %1023 = vmatpush1.bf16.xpose.msra.mxu0 0
        %1024 = vmatprep.subr.bf16.mxu0 0
        %1025 = vmatpush1.bf16.xpose.msra.mxu0 0
        %1026 = vmatprep.subr.bf16.mxu0 0
        %1027 = vmatpush1.bf16.xpose.msra.mxu0 0
        %1028 = vmatprep.subr.bf16.mxu0 0
        %1029 = vmatpush1.bf16.xpose.msra.mxu0 0
        %1030 = vmatprep.subr.bf16.mxu0 0
        %1031 = vmatpush1.bf16.xpose.msra.mxu0 0
        %1032 = vmatprep.subr.bf16.mxu0 0
        %1033 = vmatpush1.bf16.xpose.msra.mxu0 0
        %1034 = vmatprep.subr.bf16.mxu0 0
        %1035 = vmatpush1.bf16.xpose.msra.mxu0 0
        %1036 = vmatprep.subr.bf16.mxu0 0
        %1037 = vmatpush1.bf16.xpose.msra.mxu0 0
        %1038 = vmatprep.subr.bf16.mxu0 0
        %1039 = vmatpush1.bf16.xpose.msra.mxu0 0
        %1040 = vmatprep.subr.bf16.mxu0 0
        %1041 = vmatpush1.bf16.xpose.msra.mxu0 0
        %1042 = vmatprep.subr.bf16.mxu0 0
        %1043 = vmatpush1.bf16.xpose.msra.mxu0 0
        %1044 = vmatprep.subr.bf16.mxu0 0
        %1045 = vmatpush1.bf16.xpose.msra.mxu0 0
        %1046 = vmatprep.subr.bf16.mxu0 0
        %1047 = vmatpush1.bf16.xpose.msra.mxu0 0
        %1048 = vmatprep.subr.bf16.mxu0 0
        %1049 = vmatpush1.bf16.xpose.msra.mxu0 0
        %1050 = vmatprep.mubr.bf16.mxu0 0
        %1051 = vmatmul.mubr.bf16.gmra.mrb[0].mxu0 %v1013
        %v1052 = vpop.f32.mrb[0].mxu0
        %v1053 = vadd.f32 0.0, %v1052
        %v1054 = vpop.f32.mrb[0].mxu0
        %v1055 = vpop.f32.mrb[0].mxu0
        %v1056 = vpop.f32.mrb[0].mxu0
        %1057 = vdwg.mxu0
        %v1059 = vsel %vm965, %v955, 0
        %v1062 = vsel %vm965, %v959, 0
        %1064 = vmatprep.subr.bf16.mxu0 0
        %1065 = vmatpush1.bf16.xpose.msra.mxu0 %v1062
        %1066 = vmatprep.subr.bf16.mxu0 0
        %1067 = vmatpush1.bf16.xpose.msra.mxu0 0
        %1068 = vmatprep.subr.bf16.mxu0 0
        %1069 = vmatpush1.bf16.xpose.msra.mxu0 0
        %1070 = vmatprep.subr.bf16.mxu0 0
        %1071 = vmatpush1.bf16.xpose.msra.mxu0 0
        %1072 = vmatprep.subr.bf16.mxu0 0
        %1073 = vmatpush1.bf16.xpose.msra.mxu0 0
        %1074 = vmatprep.subr.bf16.mxu0 0
        %1075 = vmatpush1.bf16.xpose.msra.mxu0 0
        %1076 = vmatprep.subr.bf16.mxu0 0
        %1077 = vmatpush1.bf16.xpose.msra.mxu0 0
        %1078 = vmatprep.subr.bf16.mxu0 0
        %1079 = vmatpush1.bf16.xpose.msra.mxu0 0
        %1080 = vmatprep.subr.bf16.mxu0 0
        %1081 = vmatpush1.bf16.xpose.msra.mxu0 0
        %1082 = vmatprep.subr.bf16.mxu0 0
        %1083 = vmatpush1.bf16.xpose.msra.mxu0 0
        %1084 = vmatprep.subr.bf16.mxu0 0
        %1085 = vmatpush1.bf16.xpose.msra.mxu0 0
        %1086 = vmatprep.subr.bf16.mxu0 0
        %1087 = vmatpush1.bf16.xpose.msra.mxu0 0
        %1088 = vmatprep.subr.bf16.mxu0 0
        %1089 = vmatpush1.bf16.xpose.msra.mxu0 0
        %1090 = vmatprep.subr.bf16.mxu0 0
        %1091 = vmatpush1.bf16.xpose.msra.mxu0 0
        %1092 = vmatprep.subr.bf16.mxu0 0
        %1093 = vmatpush1.bf16.xpose.msra.mxu0 0
        %1094 = vmatprep.subr.bf16.mxu0 0
        %1095 = vmatpush1.bf16.xpose.msra.mxu0 0
        %1096 = vmatprep.mubr.bf16.mxu0 0
        %1097 = vmatmul.mubr.bf16.gmra.mrb[0].mxu0 %v1059
        %v1098 = vpop.f32.mrb[0].mxu0
        %v1099 = vadd.f32 0.0, %v1098
        %v1100 = vpop.f32.mrb[0].mxu0
        %v1101 = vpop.f32.mrb[0].mxu0
        %v1102 = vpop.f32.mrb[0].mxu0
        %1103 = vdwg.mxu0
        %v1105 = vsel %vm965, %v956, 0
        %v1108 = vsel %vm965, %v960, 0
        %1110 = vmatprep.subr.bf16.mxu0 0
        %1111 = vmatpush1.bf16.xpose.msra.mxu0 %v1108
        %1112 = vmatprep.subr.bf16.mxu0 0
        %1113 = vmatpush1.bf16.xpose.msra.mxu0 0
        %1114 = vmatprep.subr.bf16.mxu0 0
        %1115 = vmatpush1.bf16.xpose.msra.mxu0 0
        %1116 = vmatprep.subr.bf16.mxu0 0
        %1117 = vmatpush1.bf16.xpose.msra.mxu0 0
        %1118 = vmatprep.subr.bf16.mxu0 0
        %1119 = vmatpush1.bf16.xpose.msra.mxu0 0
        %1120 = vmatprep.subr.bf16.mxu0 0
        %1121 = vmatpush1.bf16.xpose.msra.mxu0 0
        %1122 = vmatprep.subr.bf16.mxu0 0
        %1123 = vmatpush1.bf16.xpose.msra.mxu0 0
        %1124 = vmatprep.subr.bf16.mxu0 0
        %1125 = vmatpush1.bf16.xpose.msra.mxu0 0
        %1126 = vmatprep.subr.bf16.mxu0 0
        %1127 = vmatpush1.bf16.xpose.msra.mxu0 0
        %1128 = vmatprep.subr.bf16.mxu0 0
        %1129 = vmatpush1.bf16.xpose.msra.mxu0 0
        %1130 = vmatprep.subr.bf16.mxu0 0
        %1131 = vmatpush1.bf16.xpose.msra.mxu0 0
        %1132 = vmatprep.subr.bf16.mxu0 0
        %1133 = vmatpush1.bf16.xpose.msra.mxu0 0
        %1134 = vmatprep.subr.bf16.mxu0 0
        %1135 = vmatpush1.bf16.xpose.msra.mxu0 0
        %1136 = vmatprep.subr.bf16.mxu0 0
        %1137 = vmatpush1.bf16.xpose.msra.mxu0 0
        %1138 = vmatprep.subr.bf16.mxu0 0
        %1139 = vmatpush1.bf16.xpose.msra.mxu0 0
        %1140 = vmatprep.subr.bf16.mxu0 0
        %1141 = vmatpush1.bf16.xpose.msra.mxu0 0
        %1142 = vmatprep.mubr.bf16.mxu0 0
        %1143 = vmatmul.mubr.bf16.gmra.mrb[0].mxu0 %v1105
        %v1144 = vpop.f32.mrb[0].mxu0
        %v1145 = vadd.f32 0.0, %v1144
        %v1146 = vpop.f32.mrb[0].mxu0
        %v1147 = vpop.f32.mrb[0].mxu0
        %v1148 = vpop.f32.mrb[0].mxu0
        %1149 = vdwg.mxu0
        %v1150 = vmul.f32 %v1007, 0.17677669
        %v1151 = vmul.f32 %v1053, 0.17677669
        %v1152 = vmul.f32 %v1099, 0.17677669
        %v1153 = vmul.f32 %v1145, 0.17677669
        %v1154 = vld [vmem:[%s1] sm:$0xf]
        %v1157 = vunpack.c.l.s4 1966171168
        %v1158 = vunpack.c.0.s8 %v1157
        %v1159 = vlaneseq
        %v1160 = vshrl.u32 %v1159, 7
        %v1161 = vsub.s32 %v1158, %v1160
        %v1162 = vrot.slane %v1154, %v1161
        %v1163 = vcombine.high %v1162, %v1162
        %v1165 = vunpack.c.l.s4 1966171168
        %v1166 = vunpack.c.0.s8 %v1165
        %v1167 = vlaneseq
        %v1168 = vshrl.u32 %v1167, 7
        %v1169 = vsub.s32 %v1166, %v1168
        %v1170 = vrot.slane %v1162, %v1169
        %v1172 = vunpack.c.l.s4 1966171168
        %v1173 = vunpack.c.0.s8 %v1172
        %v1174 = vlaneseq
        %v1175 = vshrl.u32 %v1174, 7
        %v1176 = vsub.s32 %v1173, %v1175
        %v1177 = vrot.slane %v1163, %v1176
        %v1178 = vcombine.high %v1170, %v1170
        %v1179 = vcombine.high %v1177, %v1177
        %v1180 = vlaneseq
        %v1181 = vshrl.u32 %v1180, 7
        %v1182 = vsub.s32 0, %v1181
        %v1183 = vrot.slane %v1170, %v1182
        %v1184 = vlaneseq
        %v1185 = vshrl.u32 %v1184, 7
        %v1186 = vsub.s32 0, %v1185
        %v1187 = vrot.slane %v1177, %v1186
        %v1188 = vlaneseq
        %v1189 = vshrl.u32 %v1188, 7
        %v1190 = vsub.s32 0, %v1189
        %v1191 = vrot.slane %v1178, %v1190
        %v1192 = vlaneseq
        %v1193 = vshrl.u32 %v1192, 7
        %v1194 = vsub.s32 0, %v1193
        %v1195 = vrot.slane %v1179, %v1194
        %v1200 = vadd.f32 %v1150, %v1183
        %v1201 = vadd.f32 %v1151, %v1187
        %v1202 = vadd.f32 %v1152, %v1191
        %v1203 = vadd.f32 %v1153, %v1195
        %vm1204 = vcmask 64512
        %v1205 = vsel %vm1204, %v1200, -inf
        %1206 = vmax.xlane.f32.xlu0 %v1205
        %v1207 = vpop.xlane.xlu0 %1206
        %v1208 = vsel %vm1204, %v1201, -inf
        %1209 = vmax.xlane.f32.xlu0 %v1208
        %v1210 = vpop.xlane.xlu0 %1209
        %v1211 = vsel %vm1204, %v1202, -inf
        %1212 = vmax.xlane.f32.xlu0 %v1211
        %v1213 = vpop.xlane.xlu0 %1212
        %v1214 = vsel %vm1204, %v1203, -inf
        %1215 = vmax.xlane.f32.xlu0 %v1214
        %v1216 = vpop.xlane.xlu0 %1215
        %v1217 = vsub.f32 %v1200, %v1207
        %v1218 = vsub.f32 %v1201, %v1210
        %v1219 = vsub.f32 %v1202, %v1213
        %v1220 = vsub.f32 %v1203, %v1216
        %v1221 = vmul.f32 %v1217, 1.442695
        %v1222 = vpow.pop %v1221
        %v1223 = vmul.f32 %v1218, 1.442695
        %v1224 = vpow.pop %v1223
        %v1225 = vmul.f32 %v1219, 1.442695
        %v1226 = vpow.pop %v1225
        %v1227 = vmul.f32 %v1220, 1.442695
        %v1228 = vpow.pop %v1227
        %v1229 = vsel %vm1204, %v1222, 0.0
        %1230 = vadd.xlane.f32.xlu0 %v1229
        %v1231 = vpop.xlane.xlu0 %1230
        %v1232 = vsel %vm1204, %v1224, 0.0
        %1233 = vadd.xlane.f32.xlu0 %v1232
        %v1234 = vpop.xlane.xlu0 %1233
        %v1235 = vsel %vm1204, %v1226, 0.0
        %1236 = vadd.xlane.f32.xlu0 %v1235
        %v1237 = vpop.xlane.xlu0 %1236
        %v1238 = vsel %vm1204, %v1228, 0.0
        %1239 = vadd.xlane.f32.xlu0 %v1238
        %v1240 = vpop.xlane.xlu0 %1239
        %v1241 = vrcp.pop %v1231
        %v1242 = vrcp.pop %v1234
        %v1243 = vrcp.pop %v1237
        %v1244 = vrcp.pop %v1240
        %v1245 = vmul.f32 %v1222, %v1241
        %v1246 = vmul.f32 %v1224, %v1242
        %v1247 = vmul.f32 %v1226, %v1243
        %v1248 = vmul.f32 %v1228, %v1244
        %v1249 = vpack.c.bf16 %v1245, %v1245
        %v1250 = vpack.c.bf16 %v1246, %v1246
        %v1251 = vpack.c.bf16 %v1247, %v1247
        %v1252 = vpack.c.bf16 %v1248, %v1248
        %v1254 = vsel %vm1204, %v1249, 0
        %vm1256 = vcmask 1043456
        %v1258 = vsel %vm1256, %v961, 0
        %1260 = vmatprep.subr.bf16.mxu0 0
        %1261 = vmatpush1.bf16.msra.mxu0 %v1258
        %1262 = vmatprep.subr.bf16.mxu0 0
        %1263 = vmatpush1.bf16.msra.mxu0 0
        %1264 = vmatprep.subr.bf16.mxu0 0
        %1265 = vmatpush1.bf16.msra.mxu0 0
        %1266 = vmatprep.subr.bf16.mxu0 0
        %1267 = vmatpush1.bf16.msra.mxu0 0
        %1268 = vmatprep.subr.bf16.mxu0 0
        %1269 = vmatpush1.bf16.msra.mxu0 0
        %1270 = vmatprep.subr.bf16.mxu0 0
        %1271 = vmatpush1.bf16.msra.mxu0 0
        %1272 = vmatprep.subr.bf16.mxu0 0
        %1273 = vmatpush1.bf16.msra.mxu0 0
        %1274 = vmatprep.subr.bf16.mxu0 0
        %1275 = vmatpush1.bf16.msra.mxu0 0
        %1276 = vmatprep.subr.bf16.mxu0 0
        %1277 = vmatpush1.bf16.msra.mxu0 0
        %1278 = vmatprep.subr.bf16.mxu0 0
        %1279 = vmatpush1.bf16.msra.mxu0 0
        %1280 = vmatprep.subr.bf16.mxu0 0
        %1281 = vmatpush1.bf16.msra.mxu0 0
        %1282 = vmatprep.subr.bf16.mxu0 0
        %1283 = vmatpush1.bf16.msra.mxu0 0
        %1284 = vmatprep.subr.bf16.mxu0 0
        %1285 = vmatpush1.bf16.msra.mxu0 0
        %1286 = vmatprep.subr.bf16.mxu0 0
        %1287 = vmatpush1.bf16.msra.mxu0 0
        %1288 = vmatprep.subr.bf16.mxu0 0
        %1289 = vmatpush1.bf16.msra.mxu0 0
        %1290 = vmatprep.subr.bf16.mxu0 0
        %1291 = vmatpush1.bf16.msra.mxu0 0
        %1292 = vmatprep.mubr.bf16.mxu0 0
        %1293 = vmatmul.mubr.bf16.gmra.mrb[0].mxu0 %v1254
        %v1294 = vpop.f32.mrb[0].mxu0
        %v1295 = vadd.f32 0.0, %v1294
        %v1296 = vpop.f32.mrb[0].mxu0
        %v1297 = vpop.f32.mrb[0].mxu0
        %v1298 = vpop.f32.mrb[0].mxu0
        %1299 = vdwg.mxu0
        %v1301 = vsel %vm1204, %v1250, 0
        %v1304 = vsel %vm1256, %v962, 0
        %1306 = vmatprep.subr.bf16.mxu0 0
        %1307 = vmatpush1.bf16.msra.mxu0 %v1304
        %1308 = vmatprep.subr.bf16.mxu0 0
        %1309 = vmatpush1.bf16.msra.mxu0 0
        %1310 = vmatprep.subr.bf16.mxu0 0
        %1311 = vmatpush1.bf16.msra.mxu0 0
        %1312 = vmatprep.subr.bf16.mxu0 0
        %1313 = vmatpush1.bf16.msra.mxu0 0
        %1314 = vmatprep.subr.bf16.mxu0 0
        %1315 = vmatpush1.bf16.msra.mxu0 0
        %1316 = vmatprep.subr.bf16.mxu0 0
        %1317 = vmatpush1.bf16.msra.mxu0 0
        %1318 = vmatprep.subr.bf16.mxu0 0
        %1319 = vmatpush1.bf16.msra.mxu0 0
        %1320 = vmatprep.subr.bf16.mxu0 0
        %1321 = vmatpush1.bf16.msra.mxu0 0
        %1322 = vmatprep.subr.bf16.mxu0 0
        %1323 = vmatpush1.bf16.msra.mxu0 0
        %1324 = vmatprep.subr.bf16.mxu0 0
        %1325 = vmatpush1.bf16.msra.mxu0 0
        %1326 = vmatprep.subr.bf16.mxu0 0
        %1327 = vmatpush1.bf16.msra.mxu0 0
        %1328 = vmatprep.subr.bf16.mxu0 0
        %1329 = vmatpush1.bf16.msra.mxu0 0
        %1330 = vmatprep.subr.bf16.mxu0 0
        %1331 = vmatpush1.bf16.msra.mxu0 0
        %1332 = vmatprep.subr.bf16.mxu0 0
        %1333 = vmatpush1.bf16.msra.mxu0 0
        %1334 = vmatprep.subr.bf16.mxu0 0
        %1335 = vmatpush1.bf16.msra.mxu0 0
        %1336 = vmatprep.subr.bf16.mxu0 0
        %1337 = vmatpush1.bf16.msra.mxu0 0
        %1338 = vmatprep.mubr.bf16.mxu0 0
        %1339 = vmatmul.mubr.bf16.gmra.mrb[0].mxu0 %v1301
        %v1340 = vpop.f32.mrb[0].mxu0
        %v1341 = vadd.f32 0.0, %v1340
        %v1342 = vpop.f32.mrb[0].mxu0
        %v1343 = vpop.f32.mrb[0].mxu0
        %v1344 = vpop.f32.mrb[0].mxu0
        %1345 = vdwg.mxu0
        %v1347 = vsel %vm1204, %v1251, 0
        %v1350 = vsel %vm1256, %v963, 0
        %1352 = vmatprep.subr.bf16.mxu0 0
        %1353 = vmatpush1.bf16.msra.mxu0 %v1350
        %1354 = vmatprep.subr.bf16.mxu0 0
        %1355 = vmatpush1.bf16.msra.mxu0 0
        %1356 = vmatprep.subr.bf16.mxu0 0
        %1357 = vmatpush1.bf16.msra.mxu0 0
        %1358 = vmatprep.subr.bf16.mxu0 0
        %1359 = vmatpush1.bf16.msra.mxu0 0
        %1360 = vmatprep.subr.bf16.mxu0 0
        %1361 = vmatpush1.bf16.msra.mxu0 0
        %1362 = vmatprep.subr.bf16.mxu0 0
        %1363 = vmatpush1.bf16.msra.mxu0 0
        %1364 = vmatprep.subr.bf16.mxu0 0
        %1365 = vmatpush1.bf16.msra.mxu0 0
        %1366 = vmatprep.subr.bf16.mxu0 0
        %1367 = vmatpush1.bf16.msra.mxu0 0
        %1368 = vmatprep.subr.bf16.mxu0 0
        %1369 = vmatpush1.bf16.msra.mxu0 0
        %1370 = vmatprep.subr.bf16.mxu0 0
        %1371 = vmatpush1.bf16.msra.mxu0 0
        %1372 = vmatprep.subr.bf16.mxu0 0
        %1373 = vmatpush1.bf16.msra.mxu0 0
        %1374 = vmatprep.subr.bf16.mxu0 0
        %1375 = vmatpush1.bf16.msra.mxu0 0
        %1376 = vmatprep.subr.bf16.mxu0 0
        %1377 = vmatpush1.bf16.msra.mxu0 0
        %1378 = vmatprep.subr.bf16.mxu0 0
        %1379 = vmatpush1.bf16.msra.mxu0 0
        %1380 = vmatprep.subr.bf16.mxu0 0
        %1381 = vmatpush1.bf16.msra.mxu0 0
        %1382 = vmatprep.subr.bf16.mxu0 0
        %1383 = vmatpush1.bf16.msra.mxu0 0
        %1384 = vmatprep.mubr.bf16.mxu0 0
        %1385 = vmatmul.mubr.bf16.gmra.mrb[0].mxu0 %v1347
        %v1386 = vpop.f32.mrb[0].mxu0
        %v1387 = vadd.f32 0.0, %v1386
        %v1388 = vpop.f32.mrb[0].mxu0
        %v1389 = vpop.f32.mrb[0].mxu0
        %v1390 = vpop.f32.mrb[0].mxu0
        %1391 = vdwg.mxu0
        %v1393 = vsel %vm1204, %v1252, 0
        %v1396 = vsel %vm1256, %v964, 0
        %1398 = vmatprep.subr.bf16.mxu0 0
        %1399 = vmatpush1.bf16.msra.mxu0 %v1396
        %1400 = vmatprep.subr.bf16.mxu0 0
        %1401 = vmatpush1.bf16.msra.mxu0 0
        %1402 = vmatprep.subr.bf16.mxu0 0
        %1403 = vmatpush1.bf16.msra.mxu0 0
        %1404 = vmatprep.subr.bf16.mxu0 0
        %1405 = vmatpush1.bf16.msra.mxu0 0
        %1406 = vmatprep.subr.bf16.mxu0 0
        %1407 = vmatpush1.bf16.msra.mxu0 0
        %1408 = vmatprep.subr.bf16.mxu0 0
        %1409 = vmatpush1.bf16.msra.mxu0 0
        %1410 = vmatprep.subr.bf16.mxu0 0
        %1411 = vmatpush1.bf16.msra.mxu0 0
        %1412 = vmatprep.subr.bf16.mxu0 0
        %1413 = vmatpush1.bf16.msra.mxu0 0
        %1414 = vmatprep.subr.bf16.mxu0 0
        %1415 = vmatpush1.bf16.msra.mxu0 0
        %1416 = vmatprep.subr.bf16.mxu0 0
        %1417 = vmatpush1.bf16.msra.mxu0 0
        %1418 = vmatprep.subr.bf16.mxu0 0
        %1419 = vmatpush1.bf16.msra.mxu0 0
        %1420 = vmatprep.subr.bf16.mxu0 0
        %1421 = vmatpush1.bf16.msra.mxu0 0
        %1422 = vmatprep.subr.bf16.mxu0 0
        %1423 = vmatpush1.bf16.msra.mxu0 0
        %1424 = vmatprep.subr.bf16.mxu0 0
        %1425 = vmatpush1.bf16.msra.mxu0 0
        %1426 = vmatprep.subr.bf16.mxu0 0
        %1427 = vmatpush1.bf16.msra.mxu0 0
        %1428 = vmatprep.subr.bf16.mxu0 0
        %1429 = vmatpush1.bf16.msra.mxu0 0
        %1430 = vmatprep.mubr.bf16.mxu0 0
        %1431 = vmatmul.mubr.bf16.gmra.mrb[0].mxu0 %v1393
        %v1432 = vpop.f32.mrb[0].mxu0
        %v1433 = vadd.f32 0.0, %v1432
        %v1434 = vpop.f32.mrb[0].mxu0
        %v1435 = vpop.f32.mrb[0].mxu0
        %v1436 = vpop.f32.mrb[0].mxu0
        %1437 = vdwg.mxu0
        %1440 = vrot.lane.b32.xlu0 %v1387, 32
        %v1441 = vpop.permute.xlu0 %1440
        %1442 = vrot.lane.b32.xlu0 %v1433, 32
        %v1443 = vpop.permute.xlu0 %1442
        %v1446 = vsel %vm965, %v1295, %v1441
        %v1447 = vsel %vm965, %v1341, %v1443
        %v1448 = vpack.c.bf16 %v1447, %v1446
        %v1449 = vld [vmem:[%s460] sm:$0xf]
        %v1450 = vld [vmem:[%s460 + $0x4] sm:$0xf]
        %v1451 = vld [vmem:[%s460 + $0x8] sm:$0xf]
        %v1452 = vld [vmem:[%s460 + $0xc] sm:$0xf]
        %v1453 = vld [vmem:[%s460 + $0x10] sm:$0xf]
        %v1454 = vld [vmem:[%s460 + $0x14] sm:$0xf]
        %v1455 = vld [vmem:[%s460 + $0x18] sm:$0xf]
        %v1456 = vld [vmem:[%s460 + $0x1c] sm:$0xf]
        %v1465 = vunpack.c.l.b16 %v1449
        %v1466 = vunpack.c.l.b16 %v1450
        %v1467 = vunpack.c.l.b16 %v1451
        %v1468 = vunpack.c.l.b16 %v1452
        %v1469 = vunpack.c.l.b16 %v1453
        %v1470 = vunpack.c.l.b16 %v1454
        %v1471 = vunpack.c.l.b16 %v1455
        %v1472 = vunpack.c.l.b16 %v1456
        %v1473 = vpack.c.b16 %v1466, %v1465
        %v1474 = vpack.c.b16 %v1468, %v1467
        %v1475 = vpack.c.b16 %v1470, %v1469
        %v1476 = vpack.c.b16 %v1472, %v1471
        %1481 = vrot.lane.b32.xlu0 %v682, 64
        %v1482 = vpop.permute.xlu0 %1481
        %v1485 = vsel %vm565, %v1448, 0
        %1487 = vmatprep.subr.bf16.mxu0 0
        %1488 = vmatpush1.bf16.msra.mxu0 %v1473
        %1489 = vmatprep.subr.bf16.mxu0 0
        %1490 = vmatpush1.bf16.msra.mxu0 %v1474
        %1491 = vmatprep.subr.bf16.mxu0 0
        %1492 = vmatpush1.bf16.msra.mxu0 %v1475
        %1493 = vmatprep.subr.bf16.mxu0 0
        %1494 = vmatpush1.bf16.msra.mxu0 %v1476
        %1495 = vmatprep.subr.bf16.mxu0 0
        %1496 = vmatpush1.bf16.msra.mxu0 0
        %1497 = vmatprep.subr.bf16.mxu0 0
        %1498 = vmatpush1.bf16.msra.mxu0 0
        %1499 = vmatprep.subr.bf16.mxu0 0
        %1500 = vmatpush1.bf16.msra.mxu0 0
        %1501 = vmatprep.subr.bf16.mxu0 0
        %1502 = vmatpush1.bf16.msra.mxu0 0
        %1503 = vmatprep.subr.bf16.mxu0 0
        %1504 = vmatpush1.bf16.msra.mxu0 0
        %1505 = vmatprep.subr.bf16.mxu0 0
        %1506 = vmatpush1.bf16.msra.mxu0 0
        %1507 = vmatprep.subr.bf16.mxu0 0
        %1508 = vmatpush1.bf16.msra.mxu0 0
        %1509 = vmatprep.subr.bf16.mxu0 0
        %1510 = vmatpush1.bf16.msra.mxu0 0
        %1511 = vmatprep.subr.bf16.mxu0 0
        %1512 = vmatpush1.bf16.msra.mxu0 0
        %1513 = vmatprep.subr.bf16.mxu0 0
        %1514 = vmatpush1.bf16.msra.mxu0 0
        %1515 = vmatprep.subr.bf16.mxu0 0
        %1516 = vmatpush1.bf16.msra.mxu0 0
        %1517 = vmatprep.subr.bf16.mxu0 0
        %1518 = vmatpush1.bf16.msra.mxu0 0
        %1519 = vmatprep.mubr.bf16.mxu0 0
        %1520 = vmatmul.mubr.bf16.gmra.mrb[0].mxu0 %v1485
        %v1521 = vpop.f32.mrb[0].mxu0
        %v1522 = vadd.f32 %v1482, %v1521
        %v1523 = vpop.f32.mrb[0].mxu0
        %v1524 = vpop.f32.mrb[0].mxu0
        %v1525 = vadd.f32 %v1482, %v1524
        %v1526 = vpop.f32.mrb[0].mxu0
        %1527 = vdwg.mxu0
        %v1528 = vadd.f32 %v485, %v1522
        %v1529 = vadd.f32 %v486, %v1525
        %v1530 = vsel %vm565, %v1528, 0.0
        %1531 = vadd.xlane.f32.xlu0 %v1530
        %v1532 = vpop.xlane.xlu0 %1531
        %v1533 = vsel %vm565, %v1529, 0.0
        %1534 = vadd.xlane.f32.xlu0 %v1533
        %v1535 = vpop.xlane.xlu0 %1534
        %v1536 = vrcp.pop 64.0
        %v1537 = vmul.f32 %v1532, %v1536
        %v1538 = vmul.f32 %v1535, %v1536
        %v1539 = vsub.f32 %v1528, %v1537
        %v1540 = vsub.f32 %v1529, %v1538
        %v1541 = vmul.f32 %v1539, %v1539
        %v1542 = vmul.f32 %v1540, %v1540
        %v1543 = vsel %vm565, %v1541, 0.0
        %1544 = vadd.xlane.f32.xlu0 %v1543
        %v1545 = vpop.xlane.xlu0 %1544
        %v1546 = vsel %vm565, %v1542, 0.0
        %1547 = vadd.xlane.f32.xlu0 %v1546
        %v1548 = vpop.xlane.xlu0 %1547
        %v1549 = vmul.f32 %v1545, %v1536
        %v1550 = vmul.f32 %v1548, %v1536
        %v1551 = vadd.f32 %v1549, 1e-12
        %v1552 = vadd.f32 %v1550, 1e-12
        %v1553 = vrsqrt.pop %v1551
        %v1554 = vrsqrt.pop %v1552
        %v1555 = vmul.f32 %v1539, %v1553
        %v1556 = vmul.f32 %v1540, %v1554
        %v1557 = vlaneseq
        %v1558 = vshrl.u32 %v1557, 7
        %v1559 = vsub.s32 3, %v1558
        %v1560 = vrot.slane %v488, %v1559
        %1562 = vrot.lane.b32.xlu0 %v1560, 64
        %v1563 = vpop.permute.xlu0 %1562
        %v1565 = vmul.f32 %v1555, %v1563
        %v1566 = vmul.f32 %v1556, %v1563
        %v1567 = vlaneseq
        %v1568 = vshrl.u32 %v1567, 7
        %v1569 = vsub.s32 4, %v1568
        %v1570 = vrot.slane %v488, %v1569
        %v1571 = vadd.f32 %v1565, %v1570
        %v1572 = vadd.f32 %v1566, %v1570
        %v1573 = vpack.c.bf16 %v1572, %v1571
        %v1574 = vld [vmem:[%s465] sm:$0xf]
        %v1575 = vld [vmem:[%s465 + $0x4] sm:$0xf]
        %v1576 = vld [vmem:[%s465 + $0x8] sm:$0xf]
        %v1577 = vld [vmem:[%s465 + $0xc] sm:$0xf]
        %v1578 = vld [vmem:[%s465 + $0x10] sm:$0xf]
        %v1579 = vld [vmem:[%s465 + $0x14] sm:$0xf]
        %v1580 = vld [vmem:[%s465 + $0x18] sm:$0xf]
        %v1581 = vld [vmem:[%s465 + $0x1c] sm:$0xf]
        %v1582 = vlaneseq
        %v1583 = vshrl.u32 %v1582, 7
        %v1584 = vsub.s32 2, %v1583
        %v1585 = vrot.slane %v488, %v1584
        %v1594 = vunpack.c.l.b16 %v1574
        %v1595 = vunpack.c.l.b16 %v1575
        %v1596 = vunpack.c.l.b16 %v1576
        %v1597 = vunpack.c.l.b16 %v1577
        %v1598 = vunpack.c.l.b16 %v1578
        %v1599 = vunpack.c.l.b16 %v1579
        %v1600 = vunpack.c.l.b16 %v1580
        %v1601 = vunpack.c.l.b16 %v1581
        %v1602 = vpack.c.b16 %v1595, %v1594
        %v1603 = vpack.c.b16 %v1597, %v1596
        %v1604 = vpack.c.b16 %v1599, %v1598
        %v1605 = vpack.c.b16 %v1601, %v1600
        %v1611 = vsel %vm565, %v1573, 0
        %1613 = vmatprep.subr.bf16.mxu0 0
        %1614 = vmatpush1.bf16.msra.mxu0 %v1602
        %1615 = vmatprep.subr.bf16.mxu0 0
        %1616 = vmatpush1.bf16.msra.mxu0 %v1603
        %1617 = vmatprep.subr.bf16.mxu0 0
        %1618 = vmatpush1.bf16.msra.mxu0 %v1604
        %1619 = vmatprep.subr.bf16.mxu0 0
        %1620 = vmatpush1.bf16.msra.mxu0 %v1605
        %1621 = vmatprep.subr.bf16.mxu0 0
        %1622 = vmatpush1.bf16.msra.mxu0 0
        %1623 = vmatprep.subr.bf16.mxu0 0
        %1624 = vmatpush1.bf16.msra.mxu0 0
        %1625 = vmatprep.subr.bf16.mxu0 0
        %1626 = vmatpush1.bf16.msra.mxu0 0
        %1627 = vmatprep.subr.bf16.mxu0 0
        %1628 = vmatpush1.bf16.msra.mxu0 0
        %1629 = vmatprep.subr.bf16.mxu0 0
        %1630 = vmatpush1.bf16.msra.mxu0 0
        %1631 = vmatprep.subr.bf16.mxu0 0
        %1632 = vmatpush1.bf16.msra.mxu0 0
        %1633 = vmatprep.subr.bf16.mxu0 0
        %1634 = vmatpush1.bf16.msra.mxu0 0
        %1635 = vmatprep.subr.bf16.mxu0 0
        %1636 = vmatpush1.bf16.msra.mxu0 0
        %1637 = vmatprep.subr.bf16.mxu0 0
        %1638 = vmatpush1.bf16.msra.mxu0 0
        %1639 = vmatprep.subr.bf16.mxu0 0
        %1640 = vmatpush1.bf16.msra.mxu0 0
        %1641 = vmatprep.subr.bf16.mxu0 0
        %1642 = vmatpush1.bf16.msra.mxu0 0
        %1643 = vmatprep.subr.bf16.mxu0 0
        %1644 = vmatpush1.bf16.msra.mxu0 0
        %1645 = vmatprep.mubr.bf16.mxu0 0
        %1646 = vmatmul.mubr.bf16.gmra.mrb[0].mxu0 %v1611
        %v1647 = vpop.f32.mrb[0].mxu0
        %v1648 = vadd.f32 %v1585, %v1647
        %v1649 = vpop.f32.mrb[0].mxu0
        %v1650 = vpop.f32.mrb[0].mxu0
        %v1651 = vadd.f32 %v1585, %v1650
        %v1652 = vpop.f32.mrb[0].mxu0
        %1653 = vdwg.mxu0
        %v1654 = vmul.f32 %v1648, %v1648
        %v1655 = vmul.f32 %v1651, %v1651
        %v1656 = vmul.f32 %v1648, %v1654
        %v1657 = vmul.f32 %v1651, %v1655
        %v1658 = vmul.f32 %v1656, 0.044715
        %v1659 = vmul.f32 %v1657, 0.044715
        %v1660 = vadd.f32 %v1648, %v1658
        %v1661 = vadd.f32 %v1651, %v1659
        %v1662 = vmul.f32 %v1660, 0.7978846
        %v1663 = vmul.f32 %v1661, 0.7978846
        %v1664 = vtanh.pop %v1662
        %v1665 = vtanh.pop %v1663
        %v1666 = vadd.f32 %v1664, 1.0
        %v1667 = vadd.f32 %v1665, 1.0
        %v1668 = vmul.f32 %v1666, 0.5
        %v1669 = vmul.f32 %v1667, 0.5
        %v1670 = vmul.f32 %v1648, %v1668
        %v1671 = vmul.f32 %v1651, %v1669
        %v1672 = vpack.c.bf16 %v1671, %v1670
        %v1673 = vld [vmem:[%s470] sm:$0xf]
        %v1674 = vld [vmem:[%s470 + $0x4] sm:$0xf]
        %v1675 = vld [vmem:[%s470 + $0x8] sm:$0xf]
        %v1676 = vld [vmem:[%s470 + $0xc] sm:$0xf]
        %v1677 = vld [vmem:[%s470 + $0x10] sm:$0xf]
        %v1678 = vld [vmem:[%s470 + $0x14] sm:$0xf]
        %v1679 = vld [vmem:[%s470 + $0x18] sm:$0xf]
        %v1680 = vld [vmem:[%s470 + $0x1c] sm:$0xf]
        %v1681 = vld [vmem:[%s470 + $0x20] sm:$0xf]
        %v1682 = vld [vmem:[%s470 + $0x24] sm:$0xf]
        %v1683 = vld [vmem:[%s470 + $0x28] sm:$0xf]
        %v1684 = vld [vmem:[%s470 + $0x2c] sm:$0xf]
        %v1685 = vld [vmem:[%s470 + $0x30] sm:$0xf]
        %v1686 = vld [vmem:[%s470 + $0x34] sm:$0xf]
        %v1687 = vld [vmem:[%s470 + $0x38] sm:$0xf]
        %v1688 = vld [vmem:[%s470 + $0x3c] sm:$0xf]
        %v1705 = vunpack.c.l.b16 %v1673
        %v1706 = vunpack.c.l.b16 %v1674
        %v1707 = vunpack.c.l.b16 %v1675
        %v1708 = vunpack.c.l.b16 %v1676
        %v1709 = vunpack.c.l.b16 %v1677
        %v1710 = vunpack.c.l.b16 %v1678
        %v1711 = vunpack.c.l.b16 %v1679
        %v1712 = vunpack.c.l.b16 %v1680
        %v1713 = vunpack.c.l.b16 %v1681
        %v1714 = vunpack.c.l.b16 %v1682
        %v1715 = vunpack.c.l.b16 %v1683
        %v1716 = vunpack.c.l.b16 %v1684
        %v1717 = vunpack.c.l.b16 %v1685
        %v1718 = vunpack.c.l.b16 %v1686
        %v1719 = vunpack.c.l.b16 %v1687
        %v1720 = vunpack.c.l.b16 %v1688
        %v1721 = vpack.c.b16 %v1706, %v1705
        %v1722 = vpack.c.b16 %v1708, %v1707
        %v1723 = vpack.c.b16 %v1710, %v1709
        %v1724 = vpack.c.b16 %v1712, %v1711
        %v1725 = vpack.c.b16 %v1714, %v1713
        %v1726 = vpack.c.b16 %v1716, %v1715
        %v1727 = vpack.c.b16 %v1718, %v1717
        %v1728 = vpack.c.b16 %v1720, %v1719
        %1737 = vmatprep.subr.bf16.mxu0 0
        %1738 = vmatpush1.bf16.msra.mxu0 %v1721
        %1739 = vmatprep.subr.bf16.mxu0 0
        %1740 = vmatpush1.bf16.msra.mxu0 %v1722
        %1741 = vmatprep.subr.bf16.mxu0 0
        %1742 = vmatpush1.bf16.msra.mxu0 %v1723
        %1743 = vmatprep.subr.bf16.mxu0 0
        %1744 = vmatpush1.bf16.msra.mxu0 %v1724
        %1745 = vmatprep.subr.bf16.mxu0 0
        %1746 = vmatpush1.bf16.msra.mxu0 %v1725
        %1747 = vmatprep.subr.bf16.mxu0 0
        %1748 = vmatpush1.bf16.msra.mxu0 %v1726
        %1749 = vmatprep.subr.bf16.mxu0 0
        %1750 = vmatpush1.bf16.msra.mxu0 %v1727
        %1751 = vmatprep.subr.bf16.mxu0 0
        %1752 = vmatpush1.bf16.msra.mxu0 %v1728
        %1753 = vmatprep.subr.bf16.mxu0 0
        %1754 = vmatpush1.bf16.msra.mxu0 0
        %1755 = vmatprep.subr.bf16.mxu0 0
        %1756 = vmatpush1.bf16.msra.mxu0 0
        %1757 = vmatprep.subr.bf16.mxu0 0
        %1758 = vmatpush1.bf16.msra.mxu0 0
        %1759 = vmatprep.subr.bf16.mxu0 0
        %1760 = vmatpush1.bf16.msra.mxu0 0
        %1761 = vmatprep.subr.bf16.mxu0 0
        %1762 = vmatpush1.bf16.msra.mxu0 0
        %1763 = vmatprep.subr.bf16.mxu0 0
        %1764 = vmatpush1.bf16.msra.mxu0 0
        %1765 = vmatprep.subr.bf16.mxu0 0
        %1766 = vmatpush1.bf16.msra.mxu0 0
        %1767 = vmatprep.subr.bf16.mxu0 0
        %1768 = vmatpush1.bf16.msra.mxu0 0
        %1769 = vmatprep.mubr.bf16.mxu0 0
        %1770 = vmatmul.mubr.bf16.gmra.mrb[0].mxu0 %v1672
        %v1771 = vpop.f32.mrb[0].mxu0
        %v1772 = vadd.f32 %v1560, %v1771
        %v1773 = vpop.f32.mrb[0].mxu0
        %v1774 = vpop.f32.mrb[0].mxu0
        %v1775 = vadd.f32 %v1560, %v1774
        %v1776 = vpop.f32.mrb[0].mxu0
        %1777 = vdwg.mxu0
        %v1778 = vadd.f32 %v1571, %v1772
        %v1779 = vadd.f32 %v1572, %v1775
        %v1780 = vsel %vm565, %v1778, 0.0
        %1781 = vadd.xlane.f32.xlu0 %v1780
        %v1782 = vpop.xlane.xlu0 %1781
        %v1783 = vsel %vm565, %v1779, 0.0
        %1784 = vadd.xlane.f32.xlu0 %v1783
        %v1785 = vpop.xlane.xlu0 %1784
        %v1786 = vmul.f32 %v1782, %v1536
        %v1787 = vmul.f32 %v1785, %v1536
        %v1788 = vsub.f32 %v1778, %v1786
        %v1789 = vsub.f32 %v1779, %v1787
        %v1790 = vmul.f32 %v1788, %v1788
        %v1791 = vmul.f32 %v1789, %v1789
        %v1792 = vsel %vm565, %v1790, 0.0
        %1793 = vadd.xlane.f32.xlu0 %v1792
        %v1794 = vpop.xlane.xlu0 %1793
        %v1795 = vsel %vm565, %v1791, 0.0
        %1796 = vadd.xlane.f32.xlu0 %v1795
        %v1797 = vpop.xlane.xlu0 %1796
        %v1798 = vmul.f32 %v1794, %v1536
        %v1799 = vmul.f32 %v1797, %v1536
        %v1800 = vadd.f32 %v1798, 1e-12
        %v1801 = vadd.f32 %v1799, 1e-12
        %v1802 = vrsqrt.pop %v1800
        %v1803 = vrsqrt.pop %v1801
        %v1804 = vmul.f32 %v1788, %v1802
        %v1805 = vmul.f32 %v1789, %v1803
        %1807 = vrot.lane.b32.xlu0 %v1570, 64
        %v1808 = vpop.permute.xlu0 %1807
        %v1810 = vmul.f32 %v1804, %v1808
        %v1811 = vmul.f32 %v1805, %v1808
        %v1812 = vlaneseq
        %v1813 = vshrl.u32 %v1812, 7
        %v1814 = vsub.s32 5, %v1813
        %v1815 = vrot.slane %v488, %v1814
        %v1816 = vadd.f32 %v1810, %v1815
        %v1817 = vadd.f32 %v1811, %v1815
        %1818 = vst.msk [vmem:[%s11] sm:$0xff] %vm565, %v1816
        %1819 = vst.msk [vmem:[%s11 + $0x8] sm:$0xff] %vm565, %v1817
        %p1820 = scmp.eq.s32.totalorder %s25, 1
        // Predicated region
        $region69: #{distilbert_class_forward.1} parent=63 // pred_check
          %p1821 = pneg %p1820
        $region70: #{distilbert_class_forward.1} parent=63 // pred_check_branch
          %1823 = sbr.rel (%p1821) target = $region72
        $region71: #{distilbert_class_forward.1} parent=63 // pred_region
          %v1824 = vpack.c.bf16 %v1816, %v1816
          %v1825 = vpack.c.bf16 %v1817, %v1817
          %v1826 = vld [vmem:[%s7] sm:$0xf]
          %v1827 = vld [vmem:[%s7 + $0x4] sm:$0xf]
          %v1828 = vld [vmem:[%s7 + $0x8] sm:$0xf]
          %v1829 = vld [vmem:[%s7 + $0xc] sm:$0xf]
          %v1830 = vld [vmem:[%s7 + $0x10] sm:$0xf]
          %v1831 = vld [vmem:[%s7 + $0x14] sm:$0xf]
          %v1832 = vld [vmem:[%s7 + $0x18] sm:$0xf]
          %v1833 = vld [vmem:[%s7 + $0x1c] sm:$0xf]
          %v1834 = vld [vmem:[%s8] sm:$0x1]
          %v1836 = vlaneseq
          %v1837 = vshrl.u32 %v1836, 7
          %v1838 = vsub.s32 0, %v1837
          %v1839 = vrot.slane %v1834, %v1838
          %v1843 = vunpack.c.l.b16 %v1824
          %v1844 = vunpack.c.l.b16 %v1825
          %v1845 = vrot.slane %v1844, 7
          %vm1846 = vcmask 1041409
          %v1847 = vsel %vm1846, %v1845, %v1843
          %v1848 = vpack.c.b16 %v1847, %v1847
          %v1857 = vunpack.c.l.b16 %v1826
          %v1858 = vunpack.c.l.b16 %v1827
          %v1859 = vunpack.c.l.b16 %v1828
          %v1860 = vunpack.c.l.b16 %v1829
          %v1861 = vunpack.c.l.b16 %v1830
          %v1862 = vunpack.c.l.b16 %v1831
          %v1863 = vunpack.c.l.b16 %v1832
          %v1864 = vunpack.c.l.b16 %v1833
          %v1865 = vpack.c.b16 %v1858, %v1857
          %v1866 = vpack.c.b16 %v1860, %v1859
          %v1867 = vpack.c.b16 %v1862, %v1861
          %v1868 = vpack.c.b16 %v1864, %v1863
          %v1874 = vsel %vm565, %v1848, 0
          %1876 = vmatprep.subr.bf16.mxu0 0
          %1877 = vmatpush1.bf16.msra.mxu0 %v1865
          %1878 = vmatprep.subr.bf16.mxu0 0
          %1879 = vmatpush1.bf16.msra.mxu0 %v1866
          %1880 = vmatprep.subr.bf16.mxu0 0
          %1881 = vmatpush1.bf16.msra.mxu0 %v1867
          %1882 = vmatprep.subr.bf16.mxu0 0
          %1883 = vmatpush1.bf16.msra.mxu0 %v1868
          %1884 = vmatprep.subr.bf16.mxu0 0
          %1885 = vmatpush1.bf16.msra.mxu0 0
          %1886 = vmatprep.subr.bf16.mxu0 0
          %1887 = vmatpush1.bf16.msra.mxu0 0
          %1888 = vmatprep.subr.bf16.mxu0 0
          %1889 = vmatpush1.bf16.msra.mxu0 0
          %1890 = vmatprep.subr.bf16.mxu0 0
          %1891 = vmatpush1.bf16.msra.mxu0 0
          %1892 = vmatprep.subr.bf16.mxu0 0
          %1893 = vmatpush1.bf16.msra.mxu0 0
          %1894 = vmatprep.subr.bf16.mxu0 0
          %1895 = vmatpush1.bf16.msra.mxu0 0
          %1896 = vmatprep.subr.bf16.mxu0 0
          %1897 = vmatpush1.bf16.msra.mxu0 0
          %1898 = vmatprep.subr.bf16.mxu0 0
          %1899 = vmatpush1.bf16.msra.mxu0 0
          %1900 = vmatprep.subr.bf16.mxu0 0
          %1901 = vmatpush1.bf16.msra.mxu0 0
          %1902 = vmatprep.subr.bf16.mxu0 0
          %1903 = vmatpush1.bf16.msra.mxu0 0
          %1904 = vmatprep.subr.bf16.mxu0 0
          %1905 = vmatpush1.bf16.msra.mxu0 0
          %1906 = vmatprep.subr.bf16.mxu0 0
          %1907 = vmatpush1.bf16.msra.mxu0 0
          %1908 = vmatprep.mubr.bf16.mxu0 0
          %1909 = vmatmul.mubr.bf16.gmra.mrb[0].mxu0 %v1874
          %v1910 = vpop.f32.mrb[0].mxu0
          %v1911 = vadd.f32 %v1839, %v1910
          %v1912 = vpop.f32.mrb[0].mxu0
          %v1913 = vpop.f32.mrb[0].mxu0
          %v1914 = vpop.f32.mrb[0].mxu0
          %1915 = vdwg.mxu0
          %v1916 = vmax.f32 %v1911, 0.0
          %v1917 = vpack.c.bf16 %v1916, %v1916
          %v1918 = vld [vmem:[%s9] sm:$0xf]
          %v1919 = vld [vmem:[%s9 + $0x4] sm:$0xf]
          %v1920 = vld [vmem:[%s9 + $0x8] sm:$0xf]
          %v1921 = vld [vmem:[%s9 + $0xc] sm:$0xf]
          %v1922 = vld [vmem:[%s9 + $0x10] sm:$0xf]
          %v1923 = vld [vmem:[%s9 + $0x14] sm:$0xf]
          %v1924 = vld [vmem:[%s9 + $0x18] sm:$0xf]
          %v1925 = vld [vmem:[%s9 + $0x1c] sm:$0xf]
          %v1926 = vld [vmem:[%s10] sm:$0x1]
          %v1928 = vlaneseq
          %v1929 = vshrl.u32 %v1928, 7
          %v1930 = vsub.s32 0, %v1929
          %v1931 = vrot.slane %v1926, %v1930
          %v1941 = vunpack.c.l.b16 %v1918
          %v1942 = vunpack.c.l.b16 %v1919
          %v1943 = vunpack.c.l.b16 %v1920
          %v1944 = vunpack.c.l.b16 %v1921
          %v1945 = vunpack.c.l.b16 %v1922
          %v1946 = vunpack.c.l.b16 %v1923
          %v1947 = vunpack.c.l.b16 %v1924
          %v1948 = vunpack.c.l.b16 %v1925
          %v1949 = vpack.c.b16 %v1942, %v1941
          %v1950 = vpack.c.b16 %v1944, %v1943
          %v1951 = vpack.c.b16 %v1946, %v1945
          %v1952 = vpack.c.b16 %v1948, %v1947
          %v1958 = vsel %vm565, %v1917, 0
          %1960 = vmatprep.subr.bf16.mxu0 0
          %1961 = vmatpush1.bf16.msra.mxu0 %v1949
          %1962 = vmatprep.subr.bf16.mxu0 0
          %1963 = vmatpush1.bf16.msra.mxu0 %v1950
          %1964 = vmatprep.subr.bf16.mxu0 0
          %1965 = vmatpush1.bf16.msra.mxu0 %v1951
          %1966 = vmatprep.subr.bf16.mxu0 0
          %1967 = vmatpush1.bf16.msra.mxu0 %v1952
          %1968 = vmatprep.subr.bf16.mxu0 0
          %1969 = vmatpush1.bf16.msra.mxu0 0
          %1970 = vmatprep.subr.bf16.mxu0 0
          %1971 = vmatpush1.bf16.msra.mxu0 0
          %1972 = vmatprep.subr.bf16.mxu0 0
          %1973 = vmatpush1.bf16.msra.mxu0 0
          %1974 = vmatprep.subr.bf16.mxu0 0
          %1975 = vmatpush1.bf16.msra.mxu0 0
          %1976 = vmatprep.subr.bf16.mxu0 0
          %1977 = vmatpush1.bf16.msra.mxu0 0
          %1978 = vmatprep.subr.bf16.mxu0 0
          %1979 = vmatpush1.bf16.msra.mxu0 0
          %1980 = vmatprep.subr.bf16.mxu0 0
          %1981 = vmatpush1.bf16.msra.mxu0 0
          %1982 = vmatprep.subr.bf16.mxu0 0
          %1983 = vmatpush1.bf16.msra.mxu0 0
          %1984 = vmatprep.subr.bf16.mxu0 0
          %1985 = vmatpush1.bf16.msra.mxu0 0
          %1986 = vmatprep.subr.bf16.mxu0 0
          %1987 = vmatpush1.bf16.msra.mxu0 0
          %1988 = vmatprep.subr.bf16.mxu0 0
          %1989 = vmatpush1.bf16.msra.mxu0 0
          %1990 = vmatprep.subr.bf16.mxu0 0
          %1991 = vmatpush1.bf16.msra.mxu0 0
          %1992 = vmatprep.mubr.bf16.mxu0 0
          %1993 = vmatmul.mubr.bf16.gmra.mrb[0].mxu0 %v1958
          %v1994 = vpop.f32.mrb[0].mxu0
          %v1995 = vadd.f32 %v1931, %v1994
          %v1996 = vpop.f32.mrb[0].mxu0
          %v1997 = vpop.f32.mrb[0].mxu0
          %v1998 = vpop.f32.mrb[0].mxu0
          %1999 = vdwg.mxu0
          %2000 = vst [vmem:[#allocation2] sm:$0x3] %v1995
        $region72: #{distilbert_class_forward.1} parent=63 // pred_fallthru
          _
        // Predicated region
        $region73: #{distilbert_class_forward.1} parent=63 // pred_check
          %p2001 = pneg %p294
        $region74: #{distilbert_class_forward.1} parent=63 // pred_check_branch
          %2003 = sbr.rel (%p2001) target = $region76
        $region75: #{distilbert_class_forward.1} parent=63 // pred_region
          _
        $region76: #{distilbert_class_forward.1} parent=63 // pred_fallthru
          _
        // Predicated region
        $region77: #{distilbert_class_forward.1} parent=63 // pred_check
          %p2004 = pneg %p315
        $region78: #{distilbert_class_forward.1} parent=63 // pred_check_branch
          %2006 = sbr.rel (%p2004) target = $region80
        $region79: #{distilbert_class_forward.1} parent=63 // pred_region
          %s2008 = ssub.s32 32, 32
          %2009 = vsyncadd [#allocation3], %s2008
          %s2011 = sshll.u32 [#allocation2], 4
          %s2012 = int_to_ptr.vmem [resolvable:$true] %s2011
          %2014 = dma.vmem_to_hbm [thread:$0]  %s2012, 32, %s12, [#allocation3]
        $region80: #{distilbert_class_forward.1} parent=63 // pred_fallthru
          _
        // Predicated region
        $region81: #{distilbert_class_forward.1} parent=63 // pred_check
          %p2015 = pneg %p294
        $region82: #{distilbert_class_forward.1} parent=63 // pred_check_branch
          %2017 = sbr.rel (%p2015) target = $region84
        $region83: #{distilbert_class_forward.1} parent=63 // pred_region
          _
        $region84: #{distilbert_class_forward.1} parent=63 // pred_fallthru
          _
        // Predicated region
        $region85: #{distilbert_class_forward.1} parent=63 // pred_check
          %p2018 = pneg %p315
        $region86: #{distilbert_class_forward.1} parent=63 // pred_check_branch
          %2020 = sbr.rel (%p2018) target = $region88
        $region87: #{distilbert_class_forward.1} parent=63 // pred_region
          %2021 = dma.done [#allocation3], 32
        $region88: #{distilbert_class_forward.1} parent=63 // pred_fallthru
          _
      $region64: #{distilbert_class_forward.1} parent=5 // pred_fallthru
        _
      %p2022 = scmp.le.s32.totalorder 2, %s20
      // Predicated region
      $region89: #{distilbert_class_forward.1} parent=5 // pred_check
        %p2023 = pneg %p2022
      $region90: #{distilbert_class_forward.1} parent=5 // pred_check_branch
        %2025 = sbr.rel (%p2023) target = $region92
      $region91: #{distilbert_class_forward.1} parent=5 // pred_region
        %s2026 = ssub.s32 %s20, 2
      $region92: #{distilbert_class_forward.1} parent=5 // pred_fallthru
        _
    $region6: #{distilbert_class_forward.1} parent=1 // loop_footer
      %s24 = sadd.s32 1, %s20
    $region7: #{distilbert_class_forward.1} parent=1 // loop_footer_branch
      %19 = sbr.rel target = $region3
    $region8: #{distilbert_class_forward.1} parent=1 // loop_exit
      _
    %2027 = vsyncpa [#allocation3], 1
    %s2028 = scalar_lea.sflag [#allocation3], 1
    %2029 = vsyncpa %s2028, 1

</llo_original>
